<compile_context>
chip_gen: v7x
topology: tpu7x:2x2x1
jax: 0.10.0
libtpu: 0.0.40
codegen_flags: <defaults>
</compile_context>

<pallas_src>
import jax
import jax.numpy as jnp
from jax.experimental import pallas as pl
from jax.experimental.pallas import tpu as pltpu

N_OBSERVATIONS = 6   # HIVPatient state dimension
N_ACTIONS = 4        # HIVPatient action space
HIDDEN = 200         # logical hidden width (PyTorch module)

# Padded sizes used inside the kernel (zero-padding preserves the math exactly).
OBS_PAD = 8          # sublane-friendly input feature dim
HID_PAD = 256        # multiple of 128 -> each hidden matmul is clean MXU tiles
OUT_PAD = 128        # lane-dense output slab; real Q-values live in cols [0, 4)
N_STACK = 6          # layers 2..7 stacked together
MAX_TILE_B = 512     # max rows per grid step (only the lane dim needs 128)


def dqn_kernel(x_ref, w1_ref, b1_ref, ws_ref, bs_ref, w8_ref, b8_ref, o_ref):
    """One batch tile of the 8-layer MLP. Weights bf16, MXU accumulation fp32.

    Bias add in fp32, then cast -> bf16 *before* the ReLU so the ReLU runs on
    packed bf16 vregs and feeds the next dot directly (relu/bf16 commute).
    """
    # layer 1: (TB, OBS_PAD) @ (OBS_PAD, HID_PAD)
    h = jnp.dot(x_ref[...].astype(jnp.bfloat16), w1_ref[...],
                preferred_element_type=jnp.float32) + b1_ref[...]
    h = jnp.maximum(h.astype(jnp.bfloat16), 0.0)
    # layers 2..7: one stacked (6, HID_PAD, HID_PAD) weight array, unrolled
    for i in range(N_STACK):
        h = jnp.dot(h, ws_ref[i], preferred_element_type=jnp.float32) + bs_ref[i]
        h = jnp.maximum(h.astype(jnp.bfloat16), 0.0)
    # layer 8 (no ReLU on Q-values), lane-dense (TB, OUT_PAD) store
    out = jnp.dot(h, w8_ref[...], preferred_element_type=jnp.float32) + b8_ref[...]
    o_ref[...] = out.astype(o_ref.dtype)


def pack_params(params):
    """Cast weights to bf16 and zero-pad to the kernel's padded shapes.

    Call ONCE per parameter update (not per forward) and pass the result to
    dqn_forward -- this keeps ~1 MB of scatter/cast ops out of the hot loop.
    """
    (w1, b1) = params[0]
    hidden = params[1:7]
    (w8, b8) = params[7]

    w1p = jnp.zeros((OBS_PAD, HID_PAD), jnp.bfloat16)
    w1p = w1p.at[:N_OBSERVATIONS, :HIDDEN].set(w1.astype(jnp.bfloat16))
    b1p = jnp.zeros((1, HID_PAD), jnp.float32).at[:, :HIDDEN].set(b1)

    ws = jnp.zeros((N_STACK, HID_PAD, HID_PAD), jnp.bfloat16)
    bs = jnp.zeros((N_STACK, 1, HID_PAD), jnp.float32)
    for i, (w, b) in enumerate(hidden):
        ws = ws.at[i, :HIDDEN, :HIDDEN].set(w.astype(jnp.bfloat16))
        bs = bs.at[i, :, :HIDDEN].set(b)

    w8p = jnp.zeros((HID_PAD, OUT_PAD), jnp.bfloat16)
    w8p = w8p.at[:HIDDEN, :N_ACTIONS].set(w8.astype(jnp.bfloat16))
    b8p = jnp.zeros((1, OUT_PAD), jnp.float32).at[:, :N_ACTIONS].set(b8)
    return w1p, b1p, ws, bs, w8p, b8p


def _round_up(n, m):
    return ((n + m - 1) // m) * m


def _choose_tiling(batch):
    """Pick (padded_batch, tile_b).

    Rows only need sublane(8) alignment. Small batches -> single grid step
    (per-step pipeline overhead dominates this MLP's per-tile compute).
    Large batches -> an EVEN number of <=512-row tiles so ("parallel",) can
    shard the batch across both v7x TensorCores.
    """
    pb = _round_up(max(batch, 8), 8)
    if pb <= MAX_TILE_B:
        return pb, pb
    n_tiles = 2 * ((pb + 2 * MAX_TILE_B - 1) // (2 * MAX_TILE_B))  # even count
    tile_b = _round_up((pb + n_tiles - 1) // n_tiles, 8)
    return tile_b * n_tiles, tile_b


def dqn_forward(x, packed_params):
    """x: (B, n_observations) float32. packed_params: output of pack_params."""
    w1p, b1p, ws, bs, w8p, b8p = packed_params
    batch = x.shape[0]
    padded_b, tile_b = _choose_tiling(batch)

    xp = jnp.zeros((padded_b, OBS_PAD), jnp.float32)
    xp = xp.at[:batch, :N_OBSERVATIONS].set(x.astype(jnp.float32))

    const2 = lambda i: (0, 0)
    const3 = lambda i: (0, 0, 0)

    # Footprint is tiny (<4 MiB even at tile_b=512); only raise the scoped cap
    # when the bigger training tiles / double-buffered outputs are in play.
    vmem_limit = (16 if tile_b > 256 else 8) * 1024 * 1024

    out_padded = pl.pallas_call(
        dqn_kernel,
        out_shape=jax.ShapeDtypeStruct((padded_b, OUT_PAD), jnp.float32),
        grid_spec=pltpu.PrefetchScalarGridSpec(
            num_scalar_prefetch=0,
            grid=(padded_b // tile_b,),
            in_specs=[
                pl.BlockSpec((tile_b, OBS_PAD), lambda i: (i, 0)),        # x tile
                pl.BlockSpec((OBS_PAD, HID_PAD), const2),                 # w1
                pl.BlockSpec((1, HID_PAD), const2),                       # b1
                pl.BlockSpec((N_STACK, HID_PAD, HID_PAD), const3),        # w2..w7
                pl.BlockSpec((N_STACK, 1, HID_PAD), const3),              # b2..b7
                pl.BlockSpec((HID_PAD, OUT_PAD), const2),                 # w8
                pl.BlockSpec((1, OUT_PAD), const2),                       # b8
            ],
            out_specs=pl.BlockSpec((tile_b, OUT_PAD), lambda i: (i, 0)),
        ),
        compiler_params=pltpu.CompilerParams(
            dimension_semantics=("parallel",),
            vmem_limit_bytes=vmem_limit,
        ),
    )(xp, w1p, b1p, ws, bs, w8p, b8p)

    return out_padded[:batch, :N_ACTIONS]


def init_params(key):
    """PyTorch nn.Linear default init: U(-1/sqrt(fan_in), 1/sqrt(fan_in))."""
    dims = [(N_OBSERVATIONS, HIDDEN)] + [(HIDDEN, HIDDEN)] * 6 + [(HIDDEN, N_ACTIONS)]
    params = []
    for (fan_in, fan_out) in dims:
        key, kw, kb = jax.random.split(key, 3)
        bound = 1.0 / jnp.sqrt(jnp.float32(fan_in))
        # stored as (in, out): transpose of PyTorch's (out, in) weight
        w = jax.random.uniform(kw, (fan_in, fan_out), jnp.float32, -bound, bound)
        b = jax.random.uniform(kb, (1, fan_out), jnp.float32, -bound, bound)
        params.append((w, b))
    return params


def dqn_reference(x, params):
    """Same numerical contract as the kernel: bf16 weights/activations into
    each dot, fp32 accumulation, ReLU between layers, no ReLU on the output."""
    h = x.astype(jnp.float32)
    n = len(params)
    for idx, (w, b) in enumerate(params):
        h = jnp.dot(h.astype(jnp.bfloat16), w.astype(jnp.bfloat16),
                    preferred_element_type=jnp.float32) + b
        if idx < n - 1:
            h = jnp.maximum(h, 0.0)
    return h


if __name__ == "__main__":
    key = jax.random.PRNGKey(0)
    params = init_params(key)
    packed = pack_params(params)   # packed ONCE, reused for every forward

    # Small act-selection batch (single grid step, sublane-8 padded only).
    key, kx = jax.random.split(key)
    x_small = jax.random.normal(kx, (8, N_OBSERVATIONS), jnp.float32)
    out_small = jax.block_until_ready(dqn_forward(x_small, packed))
    ref_small = dqn_reference(x_small, params)
    assert out_small.shape == (8, N_ACTIONS), out_small.shape
    assert jnp.allclose(out_small, ref_small, atol=1e-3, rtol=1e-3), \
        f"max abs err {jnp.max(jnp.abs(out_small - ref_small))}"

    # Training-sized batch (exercises the multi-tile / even-grid path).
    key, kx = jax.random.split(key)
    x_big = jax.random.normal(kx, (640, N_OBSERVATIONS), jnp.float32)
    out_big = jax.block_until_ready(dqn_forward(x_big, packed))
    ref_big = dqn_reference(x_big, params)
    assert out_big.shape == (640, N_ACTIONS), out_big.shape
    assert jnp.allclose(out_big, ref_big, atol=1e-3, rtol=1e-3), \
        f"max abs err {jnp.max(jnp.abs(out_big - ref_big))}"

    print("KERNEL_OK")
</pallas_src>

<mosaic_0001>
module attributes {stable_mosaic.version = 11 : i64} {
  func.func @dqn_kernel(%arg0: i32, %arg1: memref<8x8xf32, #tpu.memory_space<vmem>>, %arg2: memref<8x256xbf16, #tpu.memory_space<vmem>>, %arg3: memref<1x256xf32, #tpu.memory_space<vmem>>, %arg4: memref<6x256x256xbf16, #tpu.memory_space<vmem>>, %arg5: memref<6x1x256xf32, #tpu.memory_space<vmem>>, %arg6: memref<256x128xbf16, #tpu.memory_space<vmem>>, %arg7: memref<1x128xf32, #tpu.memory_space<vmem>>, %arg8: memref<8x128xf32, #tpu.memory_space<vmem>>) attributes {dimension_semantics = [#tpu.dimension_semantics<parallel>], iteration_bounds = array<i64: 1>, scalar_prefetch = 0 : i64, scratch_operands = 0 : i64, tpu.core_type = #tpu.core_type<tc>, window_params = [{transform_indices = @transform_0, window_bounds = array<i64: 8, 8>}, {pipeline_mode = #tpu.pipeline_mode<synchronous>, transform_indices = @transform_1, window_bounds = array<i64: 8, 256>}, {pipeline_mode = #tpu.pipeline_mode<synchronous>, transform_indices = @transform_2, window_bounds = array<i64: 1, 256>}, {pipeline_mode = #tpu.pipeline_mode<synchronous>, transform_indices = @transform_3, window_bounds = array<i64: 6, 256, 256>}, {pipeline_mode = #tpu.pipeline_mode<synchronous>, transform_indices = @transform_4, window_bounds = array<i64: 6, 1, 256>}, {pipeline_mode = #tpu.pipeline_mode<synchronous>, transform_indices = @transform_5, window_bounds = array<i64: 256, 128>}, {pipeline_mode = #tpu.pipeline_mode<synchronous>, transform_indices = @transform_6, window_bounds = array<i64: 1, 128>}, {transform_indices = @transform_7, window_bounds = array<i64: 8, 128>}]} {
    %c0 = arith.constant 0 : index
    %c0_0 = arith.constant 0 : index
    %0 = vector.load %arg1[%c0, %c0_0] : memref<8x8xf32, #tpu.memory_space<vmem>>, vector<8x8xf32>
    %1 = arith.truncf %0 : vector<8x8xf32> to vector<8x8xbf16>
    %c0_1 = arith.constant 0 : index
    %c0_2 = arith.constant 0 : index
    %2 = vector.load %arg2[%c0_1, %c0_2] : memref<8x256xbf16, #tpu.memory_space<vmem>>, vector<8x256xbf16>
    %cst = arith.constant dense<0.000000e+00> : vector<8x256xf32>
    %3 = tpu.matmul %1, %2, %cst {dimension_numbers = #tpu.dot_dimension_numbers<[1], [0], [0], [1], [0, 0, 1, 1], [], []>} : vector<8x8xbf16>, vector<8x256xbf16>, vector<8x256xf32> -> vector<8x256xf32>
    %c0_3 = arith.constant 0 : index
    %c0_4 = arith.constant 0 : index
    %4 = vector.load %arg3[%c0_3, %c0_4] : memref<1x256xf32, #tpu.memory_space<vmem>>, vector<1x256xf32>
    %5 = vector.broadcast %4 : vector<1x256xf32> to vector<8x256xf32>
    %6 = arith.addf %3, %5 : vector<8x256xf32>
    %7 = arith.truncf %6 : vector<8x256xf32> to vector<8x256xbf16>
    %cst_5 = arith.constant 0.000000e+00 : bf16
    %8 = vector.broadcast %cst_5 : bf16 to vector<8x256xbf16>
    %9 = arith.maximumf %7, %8 : vector<8x256xbf16>
    %c0_6 = arith.constant 0 : index
    %c0_7 = arith.constant 0 : index
    %c0_8 = arith.constant 0 : index
    %10 = vector.load %arg4[%c0_6, %c0_7, %c0_8] : memref<6x256x256xbf16, #tpu.memory_space<vmem>>, vector<1x256x256xbf16>
    %11 = vector.shape_cast %10 : vector<1x256x256xbf16> to vector<256x256xbf16>
    %cst_9 = arith.constant dense<0.000000e+00> : vector<8x256xf32>
    %12 = tpu.matmul %9, %11, %cst_9 {dimension_numbers = #tpu.dot_dimension_numbers<[1], [0], [0], [1], [0, 0, 1, 1], [], []>} : vector<8x256xbf16>, vector<256x256xbf16>, vector<8x256xf32> -> vector<8x256xf32>
    %c0_10 = arith.constant 0 : index
    %c0_11 = arith.constant 0 : index
    %c0_12 = arith.constant 0 : index
    %13 = vector.load %arg5[%c0_10, %c0_11, %c0_12] : memref<6x1x256xf32, #tpu.memory_space<vmem>>, vector<1x1x256xf32>
    %14 = vector.shape_cast %13 : vector<1x1x256xf32> to vector<1x256xf32>
    %15 = vector.broadcast %14 : vector<1x256xf32> to vector<8x256xf32>
    %16 = arith.addf %12, %15 : vector<8x256xf32>
    %17 = arith.truncf %16 : vector<8x256xf32> to vector<8x256xbf16>
    %cst_13 = arith.constant 0.000000e+00 : bf16
    %18 = vector.broadcast %cst_13 : bf16 to vector<8x256xbf16>
    %19 = arith.maximumf %17, %18 : vector<8x256xbf16>
    %c1 = arith.constant 1 : index
    %c0_14 = arith.constant 0 : index
    %c0_15 = arith.constant 0 : index
    %20 = vector.load %arg4[%c1, %c0_14, %c0_15] : memref<6x256x256xbf16, #tpu.memory_space<vmem>>, vector<1x256x256xbf16>
    %21 = vector.shape_cast %20 : vector<1x256x256xbf16> to vector<256x256xbf16>
    %cst_16 = arith.constant dense<0.000000e+00> : vector<8x256xf32>
    %22 = tpu.matmul %19, %21, %cst_16 {dimension_numbers = #tpu.dot_dimension_numbers<[1], [0], [0], [1], [0, 0, 1, 1], [], []>} : vector<8x256xbf16>, vector<256x256xbf16>, vector<8x256xf32> -> vector<8x256xf32>
    %c1_17 = arith.constant 1 : index
    %c0_18 = arith.constant 0 : index
    %c0_19 = arith.constant 0 : index
    %23 = vector.load %arg5[%c1_17, %c0_18, %c0_19] : memref<6x1x256xf32, #tpu.memory_space<vmem>>, vector<1x1x256xf32>
    %24 = vector.shape_cast %23 : vector<1x1x256xf32> to vector<1x256xf32>
    %25 = vector.broadcast %24 : vector<1x256xf32> to vector<8x256xf32>
    %26 = arith.addf %22, %25 : vector<8x256xf32>
    %27 = arith.truncf %26 : vector<8x256xf32> to vector<8x256xbf16>
    %cst_20 = arith.constant 0.000000e+00 : bf16
    %28 = vector.broadcast %cst_20 : bf16 to vector<8x256xbf16>
    %29 = arith.maximumf %27, %28 : vector<8x256xbf16>
    %c2 = arith.constant 2 : index
    %c0_21 = arith.constant 0 : index
    %c0_22 = arith.constant 0 : index
    %30 = vector.load %arg4[%c2, %c0_21, %c0_22] : memref<6x256x256xbf16, #tpu.memory_space<vmem>>, vector<1x256x256xbf16>
    %31 = vector.shape_cast %30 : vector<1x256x256xbf16> to vector<256x256xbf16>
    %cst_23 = arith.constant dense<0.000000e+00> : vector<8x256xf32>
    %32 = tpu.matmul %29, %31, %cst_23 {dimension_numbers = #tpu.dot_dimension_numbers<[1], [0], [0], [1], [0, 0, 1, 1], [], []>} : vector<8x256xbf16>, vector<256x256xbf16>, vector<8x256xf32> -> vector<8x256xf32>
    %c2_24 = arith.constant 2 : index
    %c0_25 = arith.constant 0 : index
    %c0_26 = arith.constant 0 : index
    %33 = vector.load %arg5[%c2_24, %c0_25, %c0_26] : memref<6x1x256xf32, #tpu.memory_space<vmem>>, vector<1x1x256xf32>
    %34 = vector.shape_cast %33 : vector<1x1x256xf32> to vector<1x256xf32>
    %35 = vector.broadcast %34 : vector<1x256xf32> to vector<8x256xf32>
    %36 = arith.addf %32, %35 : vector<8x256xf32>
    %37 = arith.truncf %36 : vector<8x256xf32> to vector<8x256xbf16>
    %cst_27 = arith.constant 0.000000e+00 : bf16
    %38 = vector.broadcast %cst_27 : bf16 to vector<8x256xbf16>
    %39 = arith.maximumf %37, %38 : vector<8x256xbf16>
    %c3 = arith.constant 3 : index
    %c0_28 = arith.constant 0 : index
    %c0_29 = arith.constant 0 : index
    %40 = vector.load %arg4[%c3, %c0_28, %c0_29] : memref<6x256x256xbf16, #tpu.memory_space<vmem>>, vector<1x256x256xbf16>
    %41 = vector.shape_cast %40 : vector<1x256x256xbf16> to vector<256x256xbf16>
    %cst_30 = arith.constant dense<0.000000e+00> : vector<8x256xf32>
    %42 = tpu.matmul %39, %41, %cst_30 {dimension_numbers = #tpu.dot_dimension_numbers<[1], [0], [0], [1], [0, 0, 1, 1], [], []>} : vector<8x256xbf16>, vector<256x256xbf16>, vector<8x256xf32> -> vector<8x256xf32>
    %c3_31 = arith.constant 3 : index
    %c0_32 = arith.constant 0 : index
    %c0_33 = arith.constant 0 : index
    %43 = vector.load %arg5[%c3_31, %c0_32, %c0_33] : memref<6x1x256xf32, #tpu.memory_space<vmem>>, vector<1x1x256xf32>
    %44 = vector.shape_cast %43 : vector<1x1x256xf32> to vector<1x256xf32>
    %45 = vector.broadcast %44 : vector<1x256xf32> to vector<8x256xf32>
    %46 = arith.addf %42, %45 : vector<8x256xf32>
    %47 = arith.truncf %46 : vector<8x256xf32> to vector<8x256xbf16>
    %cst_34 = arith.constant 0.000000e+00 : bf16
    %48 = vector.broadcast %cst_34 : bf16 to vector<8x256xbf16>
    %49 = arith.maximumf %47, %48 : vector<8x256xbf16>
    %c4 = arith.constant 4 : index
    %c0_35 = arith.constant 0 : index
    %c0_36 = arith.constant 0 : index
    %50 = vector.load %arg4[%c4, %c0_35, %c0_36] : memref<6x256x256xbf16, #tpu.memory_space<vmem>>, vector<1x256x256xbf16>
    %51 = vector.shape_cast %50 : vector<1x256x256xbf16> to vector<256x256xbf16>
    %cst_37 = arith.constant dense<0.000000e+00> : vector<8x256xf32>
    %52 = tpu.matmul %49, %51, %cst_37 {dimension_numbers = #tpu.dot_dimension_numbers<[1], [0], [0], [1], [0, 0, 1, 1], [], []>} : vector<8x256xbf16>, vector<256x256xbf16>, vector<8x256xf32> -> vector<8x256xf32>
    %c4_38 = arith.constant 4 : index
    %c0_39 = arith.constant 0 : index
    %c0_40 = arith.constant 0 : index
    %53 = vector.load %arg5[%c4_38, %c0_39, %c0_40] : memref<6x1x256xf32, #tpu.memory_space<vmem>>, vector<1x1x256xf32>
    %54 = vector.shape_cast %53 : vector<1x1x256xf32> to vector<1x256xf32>
    %55 = vector.broadcast %54 : vector<1x256xf32> to vector<8x256xf32>
    %56 = arith.addf %52, %55 : vector<8x256xf32>
    %57 = arith.truncf %56 : vector<8x256xf32> to vector<8x256xbf16>
    %cst_41 = arith.constant 0.000000e+00 : bf16
    %58 = vector.broadcast %cst_41 : bf16 to vector<8x256xbf16>
    %59 = arith.maximumf %57, %58 : vector<8x256xbf16>
    %c5 = arith.constant 5 : index
    %c0_42 = arith.constant 0 : index
    %c0_43 = arith.constant 0 : index
    %60 = vector.load %arg4[%c5, %c0_42, %c0_43] : memref<6x256x256xbf16, #tpu.memory_space<vmem>>, vector<1x256x256xbf16>
    %61 = vector.shape_cast %60 : vector<1x256x256xbf16> to vector<256x256xbf16>
    %cst_44 = arith.constant dense<0.000000e+00> : vector<8x256xf32>
    %62 = tpu.matmul %59, %61, %cst_44 {dimension_numbers = #tpu.dot_dimension_numbers<[1], [0], [0], [1], [0, 0, 1, 1], [], []>} : vector<8x256xbf16>, vector<256x256xbf16>, vector<8x256xf32> -> vector<8x256xf32>
    %c5_45 = arith.constant 5 : index
    %c0_46 = arith.constant 0 : index
    %c0_47 = arith.constant 0 : index
    %63 = vector.load %arg5[%c5_45, %c0_46, %c0_47] : memref<6x1x256xf32, #tpu.memory_space<vmem>>, vector<1x1x256xf32>
    %64 = vector.shape_cast %63 : vector<1x1x256xf32> to vector<1x256xf32>
    %65 = vector.broadcast %64 : vector<1x256xf32> to vector<8x256xf32>
    %66 = arith.addf %62, %65 : vector<8x256xf32>
    %67 = arith.truncf %66 : vector<8x256xf32> to vector<8x256xbf16>
    %cst_48 = arith.constant 0.000000e+00 : bf16
    %68 = vector.broadcast %cst_48 : bf16 to vector<8x256xbf16>
    %69 = arith.maximumf %67, %68 : vector<8x256xbf16>
    %c0_49 = arith.constant 0 : index
    %c0_50 = arith.constant 0 : index
    %70 = vector.load %arg6[%c0_49, %c0_50] : memref<256x128xbf16, #tpu.memory_space<vmem>>, vector<256x128xbf16>
    %cst_51 = arith.constant dense<0.000000e+00> : vector<8x128xf32>
    %71 = tpu.matmul %69, %70, %cst_51 {dimension_numbers = #tpu.dot_dimension_numbers<[1], [0], [0], [1], [0, 0, 1, 1], [], []>} : vector<8x256xbf16>, vector<256x128xbf16>, vector<8x128xf32> -> vector<8x128xf32>
    %c0_52 = arith.constant 0 : index
    %c0_53 = arith.constant 0 : index
    %72 = vector.load %arg7[%c0_52, %c0_53] : memref<1x128xf32, #tpu.memory_space<vmem>>, vector<1x128xf32>
    %73 = vector.broadcast %72 : vector<1x128xf32> to vector<8x128xf32>
    %74 = arith.addf %71, %73 : vector<8x128xf32>
    %c0_54 = arith.constant 0 : index
    %c0_55 = arith.constant 0 : index
    %75 = vector.load %arg8[%c0_54, %c0_55] : memref<8x128xf32, #tpu.memory_space<vmem>>, vector<8x128xf32>
    tpu.vector_store %arg8[%c0_54, %c0_55], %74 {strides = array<i32>} : memref<8x128xf32, #tpu.memory_space<vmem>>, vector<8x128xf32>,
    return
  }
  func.func @transform_0(%arg0: i32) -> (i32, i32) {
    %c0_i32 = arith.constant 0 : i32
    %c0_i32_0 = arith.constant 0 : i32
    return %arg0, %c0_i32 : i32, i32
  }
  func.func @transform_1(%arg0: i32) -> (i32, i32) {
    %c0_i32 = arith.constant 0 : i32
    %c0_i32_0 = arith.constant 0 : i32
    %c0_i32_1 = arith.constant 0 : i32
    return %c0_i32, %c0_i32_0 : i32, i32
  }
  func.func @transform_2(%arg0: i32) -> (i32, i32) {
    %c0_i32 = arith.constant 0 : i32
    %c0_i32_0 = arith.constant 0 : i32
    %c0_i32_1 = arith.constant 0 : i32
    return %c0_i32, %c0_i32_0 : i32, i32
  }
  func.func @transform_3(%arg0: i32) -> (i32, i32, i32) {
    %c0_i32 = arith.constant 0 : i32
    %c0_i32_0 = arith.constant 0 : i32
    %c0_i32_1 = arith.constant 0 : i32
    %c0_i32_2 = arith.constant 0 : i32
    return %c0_i32, %c0_i32_0, %c0_i32_1 : i32, i32, i32
  }
  func.func @transform_4(%arg0: i32) -> (i32, i32, i32) {
    %c0_i32 = arith.constant 0 : i32
    %c0_i32_0 = arith.constant 0 : i32
    %c0_i32_1 = arith.constant 0 : i32
    %c0_i32_2 = arith.constant 0 : i32
    return %c0_i32, %c0_i32_0, %c0_i32_1 : i32, i32, i32
  }
  func.func @transform_5(%arg0: i32) -> (i32, i32) {
    %c0_i32 = arith.constant 0 : i32
    %c0_i32_0 = arith.constant 0 : i32
    %c0_i32_1 = arith.constant 0 : i32
    return %c0_i32, %c0_i32_0 : i32, i32
  }
  func.func @transform_6(%arg0: i32) -> (i32, i32) {
    %c0_i32 = arith.constant 0 : i32
    %c0_i32_0 = arith.constant 0 : i32
    %c0_i32_1 = arith.constant 0 : i32
    return %c0_i32, %c0_i32_0 : i32, i32
  }
  func.func @transform_7(%arg0: i32) -> (i32, i32) {
    %c0_i32 = arith.constant 0 : i32
    %c0_i32_0 = arith.constant 0 : i32
    return %arg0, %c0_i32 : i32, i32
  }
}

</mosaic_0001>

<llo_original>
// kernel: tpu_custom_call.1
$region0: #{tpu_custom_call.1}
  #allocation0 [shape = 'u32[]', space=smem, size = 0x4, offset = 0x4, fixed_abs, tag = 'smem constant byte address 0x4 - core index']
  #allocation1 [shape = 'u32[144,128]{1,0:T(1,128)}', space=vmem, size = 0x12000, scoped, tag = 'internal scratch']
  %s0 = inlined_call_operand.hbm [shape: f32[8,8], index: 0, kind: input, shape index: {}]
  %s1 = inlined_call_operand.hbm [shape: bf16[8,256], index: 1, kind: input, shape index: {}]
  %s2 = inlined_call_operand.vmem [shape: f32[1,256], index: 2, kind: input, shape index: {}]
  %s3 = inlined_call_operand.hbm [shape: bf16[6,256,256], index: 3, kind: input, shape index: {}]
  %s4 = inlined_call_operand.vmem [shape: f32[6,1,256], index: 4, kind: input, shape index: {}]
  %s5 = inlined_call_operand.hbm [shape: bf16[256,128], index: 5, kind: input, shape index: {}]
  %s6 = inlined_call_operand.vmem [shape: f32[1,128], index: 6, kind: input, shape index: {}]
  %s7 = inlined_call_operand.hbm [shape: f32[8,128], index: 7, kind: output, shape index: {}]
  %s8 = sld [smem:[#allocation0]]
  $region54: #{tpu_custom_call.1} parent=0
    _
  %s10 = ssub.s32 1, %s8
  %s11 = scalar_select 0, %s10, %s8
  $region1: #{tpu_custom_call.1} parent=0
    #allocation2 [shape = 'u8[4096]{0}', space=vmem, size = 0x1000, scoped, tag = 'input window, operand 0, single buffered']
    #allocation3 [shape = 's32[1]{0}', space=sflag, size = 0x4, scoped, tag = 'scoped memory for tpu_custom_call.1']
    #allocation4 [shape = 's32[1]{0}', space=sflag, size = 0x4, scoped, tag = 'scoped memory for tpu_custom_call.1']
    #allocation5 [shape = 'u8[4096]{0}', space=vmem, size = 0x1000, scoped, tag = 'input window, operand 1, single buffered']
    #allocation6 [shape = 's32[1]{0}', space=sflag, size = 0x4, scoped, tag = 'scoped memory for tpu_custom_call.1']
    #allocation7 [shape = 'u8[786432]{0}', space=vmem, size = 0xc0000, scoped, tag = 'input window, operand 3, single buffered']
    #allocation8 [shape = 'u8[65536]{0}', space=vmem, size = 0x10000, scoped, tag = 'input window, operand 5, single buffered']
    #allocation9 [shape = 's32[1]{0}', space=sflag, size = 0x4, scoped, tag = 'scoped memory for tpu_custom_call.1']
    #allocation10 [shape = 'u8[4096]{0}', space=vmem, size = 0x1000, scoped, tag = 'output window, operand 0, single buffered']
    %12 = vsyncpa [#allocation3], 0
    %13 = vsyncpa [#allocation6], 0
    %14 = vsyncpa [#allocation9], 0
    %15 = vsyncpa [#allocation4], 0
    // Predicated region
    $region2: #{tpu_custom_call.1} parent=1 // pred_check
      _
    $region3: #{tpu_custom_call.1} parent=1 // pred_check_branch
      %17 = sbr.rel (0) target = $region5
    $region4: #{tpu_custom_call.1} parent=1 // pred_region
      %s19 = ssub.s32 128, 128
      %20 = vsyncadd [#allocation3], %s19
      %s22 = sshll.u32 [#allocation2], 4
      %s23 = int_to_ptr.vmem [resolvable:$true] %s22
      %25 = dma.hbm_to_vmem [thread:$0]  %s0, 128, %s23, [#allocation3]
    $region5: #{tpu_custom_call.1} parent=1 // pred_fallthru
      _
    // Predicated region
    $region6: #{tpu_custom_call.1} parent=1 // pred_check
      _
    $region7: #{tpu_custom_call.1} parent=1 // pred_check_branch
      %27 = sbr.rel (0) target = $region9
    $region8: #{tpu_custom_call.1} parent=1 // pred_region
      %s29 = ssub.s32 128, 128
      %30 = vsyncadd [#allocation6], %s29
      %s32 = sshll.u32 [#allocation5], 4
      %s33 = int_to_ptr.vmem [resolvable:$true] %s32
      %35 = dma.hbm_to_vmem [thread:$0]  %s1, 128, %s33, [#allocation6]
    $region9: #{tpu_custom_call.1} parent=1 // pred_fallthru
      _
    // Predicated region
    $region10: #{tpu_custom_call.1} parent=1 // pred_check
      _
    $region11: #{tpu_custom_call.1} parent=1 // pred_check_branch
      %37 = sbr.rel (0) target = $region13
    $region12: #{tpu_custom_call.1} parent=1 // pred_region
      _
    $region13: #{tpu_custom_call.1} parent=1 // pred_fallthru
      _
    // Predicated region
    $region14: #{tpu_custom_call.1} parent=1 // pred_check
      _
    $region15: #{tpu_custom_call.1} parent=1 // pred_check_branch
      %39 = sbr.rel (0) target = $region17
    $region16: #{tpu_custom_call.1} parent=1 // pred_region
      %s41 = ssub.s32 24576, 24576
      %42 = vsyncadd [#allocation6], %s41
      %s43 = sshll.u32 [#allocation7], 4
      %s44 = int_to_ptr.vmem [resolvable:$true] %s43
      %49 = dma.hbm_to_vmem [thread:$0]  %s3, 24576, %s44, [#allocation6], 128, 128, 8
    $region17: #{tpu_custom_call.1} parent=1 // pred_fallthru
      _
    // Predicated region
    $region18: #{tpu_custom_call.1} parent=1 // pred_check
      _
    $region19: #{tpu_custom_call.1} parent=1 // pred_check_branch
      %51 = sbr.rel (0) target = $region21
    $region20: #{tpu_custom_call.1} parent=1 // pred_region
      _
    $region21: #{tpu_custom_call.1} parent=1 // pred_fallthru
      _
    // Predicated region
    $region22: #{tpu_custom_call.1} parent=1 // pred_check
      _
    $region23: #{tpu_custom_call.1} parent=1 // pred_check_branch
      %53 = sbr.rel (0) target = $region25
    $region24: #{tpu_custom_call.1} parent=1 // pred_region
      %s55 = ssub.s32 2048, 2048
      %56 = vsyncadd [#allocation9], %s55
      %s57 = sshll.u32 [#allocation8], 4
      %s58 = int_to_ptr.vmem [resolvable:$true] %s57
      %63 = dma.hbm_to_vmem [thread:$0]  %s5, 2048, %s58, [#allocation9], 64, 64, 4
    $region25: #{tpu_custom_call.1} parent=1 // pred_fallthru
      _
    // Predicated region
    $region26: #{tpu_custom_call.1} parent=1 // pred_check
      _
    $region27: #{tpu_custom_call.1} parent=1 // pred_check_branch
      %65 = sbr.rel (0) target = $region29
    $region28: #{tpu_custom_call.1} parent=1 // pred_region
      _
    $region29: #{tpu_custom_call.1} parent=1 // pred_fallthru
      _
    // Predicated region
    $region30: #{tpu_custom_call.1} parent=1 // pred_check
      _
    $region31: #{tpu_custom_call.1} parent=1 // pred_check_branch
      %67 = sbr.rel (0) target = $region33
    $region32: #{tpu_custom_call.1} parent=1 // pred_region
      %68 = dma.done [#allocation3], 128
    $region33: #{tpu_custom_call.1} parent=1 // pred_fallthru
      _
    // Predicated region
    $region34: #{tpu_custom_call.1} parent=1 // pred_check
      _
    $region35: #{tpu_custom_call.1} parent=1 // pred_check_branch
      %70 = sbr.rel (0) target = $region37
    $region36: #{tpu_custom_call.1} parent=1 // pred_region
      %71 = dma.done [#allocation6], 128
    $region37: #{tpu_custom_call.1} parent=1 // pred_fallthru
      _
    // Predicated region
    $region38: #{tpu_custom_call.1} parent=1 // pred_check
      _
    $region39: #{tpu_custom_call.1} parent=1 // pred_check_branch
      %73 = sbr.rel (0) target = $region41
    $region40: #{tpu_custom_call.1} parent=1 // pred_region
      %74 = dma.done [#allocation6], 24576
    $region41: #{tpu_custom_call.1} parent=1 // pred_fallthru
      _
    // Predicated region
    $region42: #{tpu_custom_call.1} parent=1 // pred_check
      _
    $region43: #{tpu_custom_call.1} parent=1 // pred_check_branch
      %76 = sbr.rel (0) target = $region45
    $region44: #{tpu_custom_call.1} parent=1 // pred_region
      %77 = dma.done [#allocation9], 2048
    $region45: #{tpu_custom_call.1} parent=1 // pred_fallthru
      _
    %v79 = vld [vmem:[#allocation2] sm:$0xff]
    %v80 = vpack.c.bf16 %v79, %v79
    %v81 = vld [vmem:[#allocation5] sm:$0xff]
    %v82 = vld [vmem:[%s2] sm:$0x3]
    %v84 = vlaneseq
    %v85 = vshrl.u32 %v84, 7
    %v86 = vsub.s32 0, %v85
    %v87 = vrot.slane %v82, %v86
    %v88 = vlaneseq
    %v89 = vshrl.u32 %v88, 7
    %v90 = vsub.s32 1, %v89
    %v91 = vrot.slane %v82, %v90
    %v95 = vunpack.c.l.b16 %v81
    %v96 = vunpack.c.h.b16 %v81
    %v97 = vpack.c.b16 %v95, %v95
    %v98 = vpack.c.b16 %v96, %v96
    %vm99 = vcmask 64512
    %v101 = vsel %vm99, %v80, 0
    %vm103 = vcmask 1043456
    %v105 = vsel %vm103, %v97, 0
    %v108 = vsel %vm103, %v98, 0
    %110 = vmatprep.subr.bf16.mxu0 %v108
    %111 = vmatpush1.bf16.msra.mxu0 %v105
    %112 = vmatprep.subr.bf16.mxu0 0
    %113 = vmatpush1.bf16.msra.mxu0 0
    %114 = vmatprep.subr.bf16.mxu0 0
    %115 = vmatpush1.bf16.msra.mxu0 0
    %116 = vmatprep.subr.bf16.mxu0 0
    %117 = vmatpush1.bf16.msra.mxu0 0
    %118 = vmatprep.subr.bf16.mxu0 0
    %119 = vmatpush1.bf16.msra.mxu0 0
    %120 = vmatprep.subr.bf16.mxu0 0
    %121 = vmatpush1.bf16.msra.mxu0 0
    %122 = vmatprep.subr.bf16.mxu0 0
    %123 = vmatpush1.bf16.msra.mxu0 0
    %124 = vmatprep.subr.bf16.mxu0 0
    %125 = vmatpush1.bf16.msra.mxu0 0
    %126 = vmatprep.subr.bf16.mxu0 0
    %127 = vmatpush1.bf16.msra.mxu0 0
    %128 = vmatprep.subr.bf16.mxu0 0
    %129 = vmatpush1.bf16.msra.mxu0 0
    %130 = vmatprep.subr.bf16.mxu0 0
    %131 = vmatpush1.bf16.msra.mxu0 0
    %132 = vmatprep.subr.bf16.mxu0 0
    %133 = vmatpush1.bf16.msra.mxu0 0
    %134 = vmatprep.subr.bf16.mxu0 0
    %135 = vmatpush1.bf16.msra.mxu0 0
    %136 = vmatprep.subr.bf16.mxu0 0
    %137 = vmatpush1.bf16.msra.mxu0 0
    %138 = vmatprep.subr.bf16.mxu0 0
    %139 = vmatpush1.bf16.msra.mxu0 0
    %140 = vmatprep.subr.bf16.mxu0 0
    %141 = vmatpush1.bf16.msra.mxu0 0
    %142 = vmatprep.mubr.bf16.mxu0 0
    %143 = vmatmul.mubr.bf16.gmra.mrb[0].mxu0 %v101
    %v144 = vpop.f32.mrb[0].mxu0
    %v145 = vadd.f32 %v87, %v144
    %v146 = vpop.f32.mrb[0].mxu0
    %v147 = vadd.f32 %v91, %v146
    %v148 = vpop.f32.mrb[0].mxu0
    %v149 = vpop.f32.mrb[0].mxu0
    %150 = vdwg.mxu0
    %v151 = vpack.c.bf16 %v145, %v145
    %v152 = vpack.c.bf16 %v147, %v147
    %v153 = vmax.bf16 %v151, 0
    %v154 = vmax.bf16 %v152, 0
    %v155 = vld [vmem:[#allocation7] sm:$0xff]
    %v156 = vld [vmem:[#allocation7 + $0x8] sm:$0xff]
    %v157 = vld [vmem:[#allocation7 + $0x10] sm:$0xff]
    %v158 = vld [vmem:[#allocation7 + $0x18] sm:$0xff]
    %v159 = vld [vmem:[#allocation7 + $0x20] sm:$0xff]
    %v160 = vld [vmem:[#allocation7 + $0x28] sm:$0xff]
    %v161 = vld [vmem:[#allocation7 + $0x30] sm:$0xff]
    %v162 = vld [vmem:[#allocation7 + $0x38] sm:$0xff]
    %v163 = vld [vmem:[#allocation7 + $0x40] sm:$0xff]
    %v164 = vld [vmem:[#allocation7 + $0x48] sm:$0xff]
    %v165 = vld [vmem:[#allocation7 + $0x50] sm:$0xff]
    %v166 = vld [vmem:[#allocation7 + $0x58] sm:$0xff]
    %v167 = vld [vmem:[#allocation7 + $0x60] sm:$0xff]
    %v168 = vld [vmem:[#allocation7 + $0x68] sm:$0xff]
    %v169 = vld [vmem:[#allocation7 + $0x70] sm:$0xff]
    %v170 = vld [vmem:[#allocation7 + $0x78] sm:$0xff]
    %v171 = vld [vmem:[#allocation7 + $0x80] sm:$0xff]
    %v172 = vld [vmem:[#allocation7 + $0x88] sm:$0xff]
    %v173 = vld [vmem:[#allocation7 + $0x90] sm:$0xff]
    %v174 = vld [vmem:[#allocation7 + $0x98] sm:$0xff]
    %v175 = vld [vmem:[#allocation7 + $0xa0] sm:$0xff]
    %v176 = vld [vmem:[#allocation7 + $0xa8] sm:$0xff]
    %v177 = vld [vmem:[#allocation7 + $0xb0] sm:$0xff]
    %v178 = vld [vmem:[#allocation7 + $0xb8] sm:$0xff]
    %v179 = vld [vmem:[#allocation7 + $0xc0] sm:$0xff]
    %v180 = vld [vmem:[#allocation7 + $0xc8] sm:$0xff]
    %v181 = vld [vmem:[#allocation7 + $0xd0] sm:$0xff]
    %v182 = vld [vmem:[#allocation7 + $0xd8] sm:$0xff]
    %v183 = vld [vmem:[#allocation7 + $0xe0] sm:$0xff]
    %v184 = vld [vmem:[#allocation7 + $0xe8] sm:$0xff]
    %v185 = vld [vmem:[#allocation7 + $0xf0] sm:$0xff]
    %v186 = vld [vmem:[#allocation7 + $0xf8] sm:$0xff]
    %v187 = vld [vmem:[%s4] sm:$0x3]
    %v189 = vlaneseq
    %v190 = vshrl.u32 %v189, 7
    %v191 = vsub.s32 0, %v190
    %v192 = vrot.slane %v187, %v191
    %v193 = vlaneseq
    %v194 = vshrl.u32 %v193, 7
    %v195 = vsub.s32 1, %v194
    %v196 = vrot.slane %v187, %v195
    %v231 = vunpack.c.l.b16 %v155
    %v232 = vunpack.c.h.b16 %v155
    %v233 = vunpack.c.l.b16 %v156
    %v234 = vunpack.c.h.b16 %v156
    %v235 = vunpack.c.l.b16 %v157
    %v236 = vunpack.c.h.b16 %v157
    %v237 = vunpack.c.l.b16 %v158
    %v238 = vunpack.c.h.b16 %v158
    %v239 = vunpack.c.l.b16 %v159
    %v240 = vunpack.c.h.b16 %v159
    %v241 = vunpack.c.l.b16 %v160
    %v242 = vunpack.c.h.b16 %v160
    %v243 = vunpack.c.l.b16 %v161
    %v244 = vunpack.c.h.b16 %v161
    %v245 = vunpack.c.l.b16 %v162
    %v246 = vunpack.c.h.b16 %v162
    %v247 = vunpack.c.l.b16 %v163
    %v248 = vunpack.c.h.b16 %v163
    %v249 = vunpack.c.l.b16 %v164
    %v250 = vunpack.c.h.b16 %v164
    %v251 = vunpack.c.l.b16 %v165
    %v252 = vunpack.c.h.b16 %v165
    %v253 = vunpack.c.l.b16 %v166
    %v254 = vunpack.c.h.b16 %v166
    %v255 = vunpack.c.l.b16 %v167
    %v256 = vunpack.c.h.b16 %v167
    %v257 = vunpack.c.l.b16 %v168
    %v258 = vunpack.c.h.b16 %v168
    %v259 = vunpack.c.l.b16 %v169
    %v260 = vunpack.c.h.b16 %v169
    %v261 = vunpack.c.l.b16 %v170
    %v262 = vunpack.c.h.b16 %v170
    %v263 = vunpack.c.l.b16 %v171
    %v264 = vunpack.c.h.b16 %v171
    %v265 = vunpack.c.l.b16 %v172
    %v266 = vunpack.c.h.b16 %v172
    %v267 = vunpack.c.l.b16 %v173
    %v268 = vunpack.c.h.b16 %v173
    %v269 = vunpack.c.l.b16 %v174
    %v270 = vunpack.c.h.b16 %v174
    %v271 = vunpack.c.l.b16 %v175
    %v272 = vunpack.c.h.b16 %v175
    %v273 = vunpack.c.l.b16 %v176
    %v274 = vunpack.c.h.b16 %v176
    %v275 = vunpack.c.l.b16 %v177
    %v276 = vunpack.c.h.b16 %v177
    %v277 = vunpack.c.l.b16 %v178
    %v278 = vunpack.c.h.b16 %v178
    %v279 = vunpack.c.l.b16 %v179
    %v280 = vunpack.c.h.b16 %v179
    %v281 = vunpack.c.l.b16 %v180
    %v282 = vunpack.c.h.b16 %v180
    %v283 = vunpack.c.l.b16 %v181
    %v284 = vunpack.c.h.b16 %v181
    %v285 = vunpack.c.l.b16 %v182
    %v286 = vunpack.c.h.b16 %v182
    %v287 = vunpack.c.l.b16 %v183
    %v288 = vunpack.c.h.b16 %v183
    %v289 = vunpack.c.l.b16 %v184
    %v290 = vunpack.c.h.b16 %v184
    %v291 = vunpack.c.l.b16 %v185
    %v292 = vunpack.c.h.b16 %v185
    %v293 = vunpack.c.l.b16 %v186
    %v294 = vunpack.c.h.b16 %v186
    %v295 = vpack.c.b16 %v233, %v231
    %v296 = vpack.c.b16 %v234, %v232
    %v297 = vpack.c.b16 %v237, %v235
    %v298 = vpack.c.b16 %v238, %v236
    %v299 = vpack.c.b16 %v241, %v239
    %v300 = vpack.c.b16 %v242, %v240
    %v301 = vpack.c.b16 %v245, %v243
    %v302 = vpack.c.b16 %v246, %v244
    %v303 = vpack.c.b16 %v249, %v247
    %v304 = vpack.c.b16 %v250, %v248
    %v305 = vpack.c.b16 %v253, %v251
    %v306 = vpack.c.b16 %v254, %v252
    %v307 = vpack.c.b16 %v257, %v255
    %v308 = vpack.c.b16 %v258, %v256
    %v309 = vpack.c.b16 %v261, %v259
    %v310 = vpack.c.b16 %v262, %v260
    %v311 = vpack.c.b16 %v265, %v263
    %v312 = vpack.c.b16 %v266, %v264
    %v313 = vpack.c.b16 %v269, %v267
    %v314 = vpack.c.b16 %v270, %v268
    %v315 = vpack.c.b16 %v273, %v271
    %v316 = vpack.c.b16 %v274, %v272
    %v317 = vpack.c.b16 %v277, %v275
    %v318 = vpack.c.b16 %v278, %v276
    %v319 = vpack.c.b16 %v281, %v279
    %v320 = vpack.c.b16 %v282, %v280
    %v321 = vpack.c.b16 %v285, %v283
    %v322 = vpack.c.b16 %v286, %v284
    %v323 = vpack.c.b16 %v289, %v287
    %v324 = vpack.c.b16 %v290, %v288
    %v325 = vpack.c.b16 %v293, %v291
    %v326 = vpack.c.b16 %v294, %v292
    %359 = vmatprep.subr.bf16.mxu0 %v296
    %360 = vmatpush1.bf16.msra.mxu0 %v295
    %361 = vmatprep.subr.bf16.mxu0 %v298
    %362 = vmatpush1.bf16.msra.mxu0 %v297
    %363 = vmatprep.subr.bf16.mxu0 %v300
    %364 = vmatpush1.bf16.msra.mxu0 %v299
    %365 = vmatprep.subr.bf16.mxu0 %v302
    %366 = vmatpush1.bf16.msra.mxu0 %v301
    %367 = vmatprep.subr.bf16.mxu0 %v304
    %368 = vmatpush1.bf16.msra.mxu0 %v303
    %369 = vmatprep.subr.bf16.mxu0 %v306
    %370 = vmatpush1.bf16.msra.mxu0 %v305
    %371 = vmatprep.subr.bf16.mxu0 %v308
    %372 = vmatpush1.bf16.msra.mxu0 %v307
    %373 = vmatprep.subr.bf16.mxu0 %v310
    %374 = vmatpush1.bf16.msra.mxu0 %v309
    %375 = vmatprep.subr.bf16.mxu0 %v312
    %376 = vmatpush1.bf16.msra.mxu0 %v311
    %377 = vmatprep.subr.bf16.mxu0 %v314
    %378 = vmatpush1.bf16.msra.mxu0 %v313
    %379 = vmatprep.subr.bf16.mxu0 %v316
    %380 = vmatpush1.bf16.msra.mxu0 %v315
    %381 = vmatprep.subr.bf16.mxu0 %v318
    %382 = vmatpush1.bf16.msra.mxu0 %v317
    %383 = vmatprep.subr.bf16.mxu0 %v320
    %384 = vmatpush1.bf16.msra.mxu0 %v319
    %385 = vmatprep.subr.bf16.mxu0 %v322
    %386 = vmatpush1.bf16.msra.mxu0 %v321
    %387 = vmatprep.subr.bf16.mxu0 %v324
    %388 = vmatpush1.bf16.msra.mxu0 %v323
    %389 = vmatprep.subr.bf16.mxu0 %v326
    %390 = vmatpush1.bf16.msra.mxu0 %v325
    %391 = vmatprep.mubr.bf16.mxu0 %v154
    %392 = vmatmul.mubr.bf16.gmra.mrb[0].mxu0 %v153
    %v393 = vpop.f32.mrb[0].mxu0
    %v394 = vadd.f32 %v192, %v393
    %v395 = vpop.f32.mrb[0].mxu0
    %v396 = vadd.f32 %v196, %v395
    %v397 = vpop.f32.mrb[0].mxu0
    %v398 = vpop.f32.mrb[0].mxu0
    %399 = vdwg.mxu0
    %v400 = vpack.c.bf16 %v394, %v394
    %v401 = vpack.c.bf16 %v396, %v396
    %v402 = vmax.bf16 %v400, 0
    %v403 = vmax.bf16 %v401, 0
    %s404 = scalar_lea.vmem [#allocation7], 256
    %v405 = vld [vmem:[%s404] sm:$0xff]
    %v406 = vld [vmem:[%s404 + $0x8] sm:$0xff]
    %v407 = vld [vmem:[%s404 + $0x10] sm:$0xff]
    %v408 = vld [vmem:[%s404 + $0x18] sm:$0xff]
    %v409 = vld [vmem:[%s404 + $0x20] sm:$0xff]
    %v410 = vld [vmem:[%s404 + $0x28] sm:$0xff]
    %v411 = vld [vmem:[%s404 + $0x30] sm:$0xff]
    %v412 = vld [vmem:[%s404 + $0x38] sm:$0xff]
    %v413 = vld [vmem:[%s404 + $0x40] sm:$0xff]
    %v414 = vld [vmem:[%s404 + $0x48] sm:$0xff]
    %v415 = vld [vmem:[%s404 + $0x50] sm:$0xff]
    %v416 = vld [vmem:[%s404 + $0x58] sm:$0xff]
    %v417 = vld [vmem:[%s404 + $0x60] sm:$0xff]
    %v418 = vld [vmem:[%s404 + $0x68] sm:$0xff]
    %v419 = vld [vmem:[%s404 + $0x70] sm:$0xff]
    %v420 = vld [vmem:[%s404 + $0x78] sm:$0xff]
    %v421 = vld [vmem:[%s404 + $0x80] sm:$0xff]
    %v422 = vld [vmem:[%s404 + $0x88] sm:$0xff]
    %v423 = vld [vmem:[%s404 + $0x90] sm:$0xff]
    %v424 = vld [vmem:[%s404 + $0x98] sm:$0xff]
    %v425 = vld [vmem:[%s404 + $0xa0] sm:$0xff]
    %v426 = vld [vmem:[%s404 + $0xa8] sm:$0xff]
    %v427 = vld [vmem:[%s404 + $0xb0] sm:$0xff]
    %v428 = vld [vmem:[%s404 + $0xb8] sm:$0xff]
    %v429 = vld [vmem:[%s404 + $0xc0] sm:$0xff]
    %v430 = vld [vmem:[%s404 + $0xc8] sm:$0xff]
    %v431 = vld [vmem:[%s404 + $0xd0] sm:$0xff]
    %v432 = vld [vmem:[%s404 + $0xd8] sm:$0xff]
    %v433 = vld [vmem:[%s404 + $0xe0] sm:$0xff]
    %v434 = vld [vmem:[%s404 + $0xe8] sm:$0xff]
    %v435 = vld [vmem:[%s404 + $0xf0] sm:$0xff]
    %v436 = vld [vmem:[%s404 + $0xf8] sm:$0xff]
    %s437 = scalar_lea.vmem %s4, 2
    %v438 = vld [vmem:[%s437] sm:$0x3]
    %v440 = vlaneseq
    %v441 = vshrl.u32 %v440, 7
    %v442 = vsub.s32 0, %v441
    %v443 = vrot.slane %v438, %v442
    %v444 = vlaneseq
    %v445 = vshrl.u32 %v444, 7
    %v446 = vsub.s32 1, %v445
    %v447 = vrot.slane %v438, %v446
    %v482 = vunpack.c.l.b16 %v405
    %v483 = vunpack.c.h.b16 %v405
    %v484 = vunpack.c.l.b16 %v406
    %v485 = vunpack.c.h.b16 %v406
    %v486 = vunpack.c.l.b16 %v407
    %v487 = vunpack.c.h.b16 %v407
    %v488 = vunpack.c.l.b16 %v408
    %v489 = vunpack.c.h.b16 %v408
    %v490 = vunpack.c.l.b16 %v409
    %v491 = vunpack.c.h.b16 %v409
    %v492 = vunpack.c.l.b16 %v410
    %v493 = vunpack.c.h.b16 %v410
    %v494 = vunpack.c.l.b16 %v411
    %v495 = vunpack.c.h.b16 %v411
    %v496 = vunpack.c.l.b16 %v412
    %v497 = vunpack.c.h.b16 %v412
    %v498 = vunpack.c.l.b16 %v413
    %v499 = vunpack.c.h.b16 %v413
    %v500 = vunpack.c.l.b16 %v414
    %v501 = vunpack.c.h.b16 %v414
    %v502 = vunpack.c.l.b16 %v415
    %v503 = vunpack.c.h.b16 %v415
    %v504 = vunpack.c.l.b16 %v416
    %v505 = vunpack.c.h.b16 %v416
    %v506 = vunpack.c.l.b16 %v417
    %v507 = vunpack.c.h.b16 %v417
    %v508 = vunpack.c.l.b16 %v418
    %v509 = vunpack.c.h.b16 %v418
    %v510 = vunpack.c.l.b16 %v419
    %v511 = vunpack.c.h.b16 %v419
    %v512 = vunpack.c.l.b16 %v420
    %v513 = vunpack.c.h.b16 %v420
    %v514 = vunpack.c.l.b16 %v421
    %v515 = vunpack.c.h.b16 %v421
    %v516 = vunpack.c.l.b16 %v422
    %v517 = vunpack.c.h.b16 %v422
    %v518 = vunpack.c.l.b16 %v423
    %v519 = vunpack.c.h.b16 %v423
    %v520 = vunpack.c.l.b16 %v424
    %v521 = vunpack.c.h.b16 %v424
    %v522 = vunpack.c.l.b16 %v425
    %v523 = vunpack.c.h.b16 %v425
    %v524 = vunpack.c.l.b16 %v426
    %v525 = vunpack.c.h.b16 %v426
    %v526 = vunpack.c.l.b16 %v427
    %v527 = vunpack.c.h.b16 %v427
    %v528 = vunpack.c.l.b16 %v428
    %v529 = vunpack.c.h.b16 %v428
    %v530 = vunpack.c.l.b16 %v429
    %v531 = vunpack.c.h.b16 %v429
    %v532 = vunpack.c.l.b16 %v430
    %v533 = vunpack.c.h.b16 %v430
    %v534 = vunpack.c.l.b16 %v431
    %v535 = vunpack.c.h.b16 %v431
    %v536 = vunpack.c.l.b16 %v432
    %v537 = vunpack.c.h.b16 %v432
    %v538 = vunpack.c.l.b16 %v433
    %v539 = vunpack.c.h.b16 %v433
    %v540 = vunpack.c.l.b16 %v434
    %v541 = vunpack.c.h.b16 %v434
    %v542 = vunpack.c.l.b16 %v435
    %v543 = vunpack.c.h.b16 %v435
    %v544 = vunpack.c.l.b16 %v436
    %v545 = vunpack.c.h.b16 %v436
    %v546 = vpack.c.b16 %v484, %v482
    %v547 = vpack.c.b16 %v485, %v483
    %v548 = vpack.c.b16 %v488, %v486
    %v549 = vpack.c.b16 %v489, %v487
    %v550 = vpack.c.b16 %v492, %v490
    %v551 = vpack.c.b16 %v493, %v491
    %v552 = vpack.c.b16 %v496, %v494
    %v553 = vpack.c.b16 %v497, %v495
    %v554 = vpack.c.b16 %v500, %v498
    %v555 = vpack.c.b16 %v501, %v499
    %v556 = vpack.c.b16 %v504, %v502
    %v557 = vpack.c.b16 %v505, %v503
    %v558 = vpack.c.b16 %v508, %v506
    %v559 = vpack.c.b16 %v509, %v507
    %v560 = vpack.c.b16 %v512, %v510
    %v561 = vpack.c.b16 %v513, %v511
    %v562 = vpack.c.b16 %v516, %v514
    %v563 = vpack.c.b16 %v517, %v515
    %v564 = vpack.c.b16 %v520, %v518
    %v565 = vpack.c.b16 %v521, %v519
    %v566 = vpack.c.b16 %v524, %v522
    %v567 = vpack.c.b16 %v525, %v523
    %v568 = vpack.c.b16 %v528, %v526
    %v569 = vpack.c.b16 %v529, %v527
    %v570 = vpack.c.b16 %v532, %v530
    %v571 = vpack.c.b16 %v533, %v531
    %v572 = vpack.c.b16 %v536, %v534
    %v573 = vpack.c.b16 %v537, %v535
    %v574 = vpack.c.b16 %v540, %v538
    %v575 = vpack.c.b16 %v541, %v539
    %v576 = vpack.c.b16 %v544, %v542
    %v577 = vpack.c.b16 %v545, %v543
    %610 = vmatprep.subr.bf16.mxu0 %v547
    %611 = vmatpush1.bf16.msra.mxu0 %v546
    %612 = vmatprep.subr.bf16.mxu0 %v549
    %613 = vmatpush1.bf16.msra.mxu0 %v548
    %614 = vmatprep.subr.bf16.mxu0 %v551
    %615 = vmatpush1.bf16.msra.mxu0 %v550
    %616 = vmatprep.subr.bf16.mxu0 %v553
    %617 = vmatpush1.bf16.msra.mxu0 %v552
    %618 = vmatprep.subr.bf16.mxu0 %v555
    %619 = vmatpush1.bf16.msra.mxu0 %v554
    %620 = vmatprep.subr.bf16.mxu0 %v557
    %621 = vmatpush1.bf16.msra.mxu0 %v556
    %622 = vmatprep.subr.bf16.mxu0 %v559
    %623 = vmatpush1.bf16.msra.mxu0 %v558
    %624 = vmatprep.subr.bf16.mxu0 %v561
    %625 = vmatpush1.bf16.msra.mxu0 %v560
    %626 = vmatprep.subr.bf16.mxu0 %v563
    %627 = vmatpush1.bf16.msra.mxu0 %v562
    %628 = vmatprep.subr.bf16.mxu0 %v565
    %629 = vmatpush1.bf16.msra.mxu0 %v564
    %630 = vmatprep.subr.bf16.mxu0 %v567
    %631 = vmatpush1.bf16.msra.mxu0 %v566
    %632 = vmatprep.subr.bf16.mxu0 %v569
    %633 = vmatpush1.bf16.msra.mxu0 %v568
    %634 = vmatprep.subr.bf16.mxu0 %v571
    %635 = vmatpush1.bf16.msra.mxu0 %v570
    %636 = vmatprep.subr.bf16.mxu0 %v573
    %637 = vmatpush1.bf16.msra.mxu0 %v572
    %638 = vmatprep.subr.bf16.mxu0 %v575
    %639 = vmatpush1.bf16.msra.mxu0 %v574
    %640 = vmatprep.subr.bf16.mxu0 %v577
    %641 = vmatpush1.bf16.msra.mxu0 %v576
    %642 = vmatprep.mubr.bf16.mxu0 %v403
    %643 = vmatmul.mubr.bf16.gmra.mrb[0].mxu0 %v402
    %v644 = vpop.f32.mrb[0].mxu0
    %v645 = vadd.f32 %v443, %v644
    %v646 = vpop.f32.mrb[0].mxu0
    %v647 = vadd.f32 %v447, %v646
    %v648 = vpop.f32.mrb[0].mxu0
    %v649 = vpop.f32.mrb[0].mxu0
    %650 = vdwg.mxu0
    %v651 = vpack.c.bf16 %v645, %v645
    %v652 = vpack.c.bf16 %v647, %v647
    %v653 = vmax.bf16 %v651, 0
    %v654 = vmax.bf16 %v652, 0
    %s655 = scalar_lea.vmem [#allocation7], 512
    %v656 = vld [vmem:[%s655] sm:$0xff]
    %v657 = vld [vmem:[%s655 + $0x8] sm:$0xff]
    %v658 = vld [vmem:[%s655 + $0x10] sm:$0xff]
    %v659 = vld [vmem:[%s655 + $0x18] sm:$0xff]
    %v660 = vld [vmem:[%s655 + $0x20] sm:$0xff]
    %v661 = vld [vmem:[%s655 + $0x28] sm:$0xff]
    %v662 = vld [vmem:[%s655 + $0x30] sm:$0xff]
    %v663 = vld [vmem:[%s655 + $0x38] sm:$0xff]
    %v664 = vld [vmem:[%s655 + $0x40] sm:$0xff]
    %v665 = vld [vmem:[%s655 + $0x48] sm:$0xff]
    %v666 = vld [vmem:[%s655 + $0x50] sm:$0xff]
    %v667 = vld [vmem:[%s655 + $0x58] sm:$0xff]
    %v668 = vld [vmem:[%s655 + $0x60] sm:$0xff]
    %v669 = vld [vmem:[%s655 + $0x68] sm:$0xff]
    %v670 = vld [vmem:[%s655 + $0x70] sm:$0xff]
    %v671 = vld [vmem:[%s655 + $0x78] sm:$0xff]
    %v672 = vld [vmem:[%s655 + $0x80] sm:$0xff]
    %v673 = vld [vmem:[%s655 + $0x88] sm:$0xff]
    %v674 = vld [vmem:[%s655 + $0x90] sm:$0xff]
    %v675 = vld [vmem:[%s655 + $0x98] sm:$0xff]
    %v676 = vld [vmem:[%s655 + $0xa0] sm:$0xff]
    %v677 = vld [vmem:[%s655 + $0xa8] sm:$0xff]
    %v678 = vld [vmem:[%s655 + $0xb0] sm:$0xff]
    %v679 = vld [vmem:[%s655 + $0xb8] sm:$0xff]
    %v680 = vld [vmem:[%s655 + $0xc0] sm:$0xff]
    %v681 = vld [vmem:[%s655 + $0xc8] sm:$0xff]
    %v682 = vld [vmem:[%s655 + $0xd0] sm:$0xff]
    %v683 = vld [vmem:[%s655 + $0xd8] sm:$0xff]
    %v684 = vld [vmem:[%s655 + $0xe0] sm:$0xff]
    %v685 = vld [vmem:[%s655 + $0xe8] sm:$0xff]
    %v686 = vld [vmem:[%s655 + $0xf0] sm:$0xff]
    %v687 = vld [vmem:[%s655 + $0xf8] sm:$0xff]
    %s688 = scalar_lea.vmem %s4, 4
    %v689 = vld [vmem:[%s688] sm:$0x3]
    %v691 = vlaneseq
    %v692 = vshrl.u32 %v691, 7
    %v693 = vsub.s32 0, %v692
    %v694 = vrot.slane %v689, %v693
    %v695 = vlaneseq
    %v696 = vshrl.u32 %v695, 7
    %v697 = vsub.s32 1, %v696
    %v698 = vrot.slane %v689, %v697
    %v733 = vunpack.c.l.b16 %v656
    %v734 = vunpack.c.h.b16 %v656
    %v735 = vunpack.c.l.b16 %v657
    %v736 = vunpack.c.h.b16 %v657
    %v737 = vunpack.c.l.b16 %v658
    %v738 = vunpack.c.h.b16 %v658
    %v739 = vunpack.c.l.b16 %v659
    %v740 = vunpack.c.h.b16 %v659
    %v741 = vunpack.c.l.b16 %v660
    %v742 = vunpack.c.h.b16 %v660
    %v743 = vunpack.c.l.b16 %v661
    %v744 = vunpack.c.h.b16 %v661
    %v745 = vunpack.c.l.b16 %v662
    %v746 = vunpack.c.h.b16 %v662
    %v747 = vunpack.c.l.b16 %v663
    %v748 = vunpack.c.h.b16 %v663
    %v749 = vunpack.c.l.b16 %v664
    %v750 = vunpack.c.h.b16 %v664
    %v751 = vunpack.c.l.b16 %v665
    %v752 = vunpack.c.h.b16 %v665
    %v753 = vunpack.c.l.b16 %v666
    %v754 = vunpack.c.h.b16 %v666
    %v755 = vunpack.c.l.b16 %v667
    %v756 = vunpack.c.h.b16 %v667
    %v757 = vunpack.c.l.b16 %v668
    %v758 = vunpack.c.h.b16 %v668
    %v759 = vunpack.c.l.b16 %v669
    %v760 = vunpack.c.h.b16 %v669
    %v761 = vunpack.c.l.b16 %v670
    %v762 = vunpack.c.h.b16 %v670
    %v763 = vunpack.c.l.b16 %v671
    %v764 = vunpack.c.h.b16 %v671
    %v765 = vunpack.c.l.b16 %v672
    %v766 = vunpack.c.h.b16 %v672
    %v767 = vunpack.c.l.b16 %v673
    %v768 = vunpack.c.h.b16 %v673
    %v769 = vunpack.c.l.b16 %v674
    %v770 = vunpack.c.h.b16 %v674
    %v771 = vunpack.c.l.b16 %v675
    %v772 = vunpack.c.h.b16 %v675
    %v773 = vunpack.c.l.b16 %v676
    %v774 = vunpack.c.h.b16 %v676
    %v775 = vunpack.c.l.b16 %v677
    %v776 = vunpack.c.h.b16 %v677
    %v777 = vunpack.c.l.b16 %v678
    %v778 = vunpack.c.h.b16 %v678
    %v779 = vunpack.c.l.b16 %v679
    %v780 = vunpack.c.h.b16 %v679
    %v781 = vunpack.c.l.b16 %v680
    %v782 = vunpack.c.h.b16 %v680
    %v783 = vunpack.c.l.b16 %v681
    %v784 = vunpack.c.h.b16 %v681
    %v785 = vunpack.c.l.b16 %v682
    %v786 = vunpack.c.h.b16 %v682
    %v787 = vunpack.c.l.b16 %v683
    %v788 = vunpack.c.h.b16 %v683
    %v789 = vunpack.c.l.b16 %v684
    %v790 = vunpack.c.h.b16 %v684
    %v791 = vunpack.c.l.b16 %v685
    %v792 = vunpack.c.h.b16 %v685
    %v793 = vunpack.c.l.b16 %v686
    %v794 = vunpack.c.h.b16 %v686
    %v795 = vunpack.c.l.b16 %v687
    %v796 = vunpack.c.h.b16 %v687
    %v797 = vpack.c.b16 %v735, %v733
    %v798 = vpack.c.b16 %v736, %v734
    %v799 = vpack.c.b16 %v739, %v737
    %v800 = vpack.c.b16 %v740, %v738
    %v801 = vpack.c.b16 %v743, %v741
    %v802 = vpack.c.b16 %v744, %v742
    %v803 = vpack.c.b16 %v747, %v745
    %v804 = vpack.c.b16 %v748, %v746
    %v805 = vpack.c.b16 %v751, %v749
    %v806 = vpack.c.b16 %v752, %v750
    %v807 = vpack.c.b16 %v755, %v753
    %v808 = vpack.c.b16 %v756, %v754
    %v809 = vpack.c.b16 %v759, %v757
    %v810 = vpack.c.b16 %v760, %v758
    %v811 = vpack.c.b16 %v763, %v761
    %v812 = vpack.c.b16 %v764, %v762
    %v813 = vpack.c.b16 %v767, %v765
    %v814 = vpack.c.b16 %v768, %v766
    %v815 = vpack.c.b16 %v771, %v769
    %v816 = vpack.c.b16 %v772, %v770
    %v817 = vpack.c.b16 %v775, %v773
    %v818 = vpack.c.b16 %v776, %v774
    %v819 = vpack.c.b16 %v779, %v777
    %v820 = vpack.c.b16 %v780, %v778
    %v821 = vpack.c.b16 %v783, %v781
    %v822 = vpack.c.b16 %v784, %v782
    %v823 = vpack.c.b16 %v787, %v785
    %v824 = vpack.c.b16 %v788, %v786
    %v825 = vpack.c.b16 %v791, %v789
    %v826 = vpack.c.b16 %v792, %v790
    %v827 = vpack.c.b16 %v795, %v793
    %v828 = vpack.c.b16 %v796, %v794
    %861 = vmatprep.subr.bf16.mxu0 %v798
    %862 = vmatpush1.bf16.msra.mxu0 %v797
    %863 = vmatprep.subr.bf16.mxu0 %v800
    %864 = vmatpush1.bf16.msra.mxu0 %v799
    %865 = vmatprep.subr.bf16.mxu0 %v802
    %866 = vmatpush1.bf16.msra.mxu0 %v801
    %867 = vmatprep.subr.bf16.mxu0 %v804
    %868 = vmatpush1.bf16.msra.mxu0 %v803
    %869 = vmatprep.subr.bf16.mxu0 %v806
    %870 = vmatpush1.bf16.msra.mxu0 %v805
    %871 = vmatprep.subr.bf16.mxu0 %v808
    %872 = vmatpush1.bf16.msra.mxu0 %v807
    %873 = vmatprep.subr.bf16.mxu0 %v810
    %874 = vmatpush1.bf16.msra.mxu0 %v809
    %875 = vmatprep.subr.bf16.mxu0 %v812
    %876 = vmatpush1.bf16.msra.mxu0 %v811
    %877 = vmatprep.subr.bf16.mxu0 %v814
    %878 = vmatpush1.bf16.msra.mxu0 %v813
    %879 = vmatprep.subr.bf16.mxu0 %v816
    %880 = vmatpush1.bf16.msra.mxu0 %v815
    %881 = vmatprep.subr.bf16.mxu0 %v818
    %882 = vmatpush1.bf16.msra.mxu0 %v817
    %883 = vmatprep.subr.bf16.mxu0 %v820
    %884 = vmatpush1.bf16.msra.mxu0 %v819
    %885 = vmatprep.subr.bf16.mxu0 %v822
    %886 = vmatpush1.bf16.msra.mxu0 %v821
    %887 = vmatprep.subr.bf16.mxu0 %v824
    %888 = vmatpush1.bf16.msra.mxu0 %v823
    %889 = vmatprep.subr.bf16.mxu0 %v826
    %890 = vmatpush1.bf16.msra.mxu0 %v825
    %891 = vmatprep.subr.bf16.mxu0 %v828
    %892 = vmatpush1.bf16.msra.mxu0 %v827
    %893 = vmatprep.mubr.bf16.mxu0 %v654
    %894 = vmatmul.mubr.bf16.gmra.mrb[0].mxu0 %v653
    %v895 = vpop.f32.mrb[0].mxu0
    %v896 = vadd.f32 %v694, %v895
    %v897 = vpop.f32.mrb[0].mxu0
    %v898 = vadd.f32 %v698, %v897
    %v899 = vpop.f32.mrb[0].mxu0
    %v900 = vpop.f32.mrb[0].mxu0
    %901 = vdwg.mxu0
    %v902 = vpack.c.bf16 %v896, %v896
    %v903 = vpack.c.bf16 %v898, %v898
    %v904 = vmax.bf16 %v902, 0
    %v905 = vmax.bf16 %v903, 0
    %s906 = scalar_lea.vmem [#allocation7], 768
    %v907 = vld [vmem:[%s906] sm:$0xff]
    %v908 = vld [vmem:[%s906 + $0x8] sm:$0xff]
    %v909 = vld [vmem:[%s906 + $0x10] sm:$0xff]
    %v910 = vld [vmem:[%s906 + $0x18] sm:$0xff]
    %v911 = vld [vmem:[%s906 + $0x20] sm:$0xff]
    %v912 = vld [vmem:[%s906 + $0x28] sm:$0xff]
    %v913 = vld [vmem:[%s906 + $0x30] sm:$0xff]
    %v914 = vld [vmem:[%s906 + $0x38] sm:$0xff]
    %v915 = vld [vmem:[%s906 + $0x40] sm:$0xff]
    %v916 = vld [vmem:[%s906 + $0x48] sm:$0xff]
    %v917 = vld [vmem:[%s906 + $0x50] sm:$0xff]
    %v918 = vld [vmem:[%s906 + $0x58] sm:$0xff]
    %v919 = vld [vmem:[%s906 + $0x60] sm:$0xff]
    %v920 = vld [vmem:[%s906 + $0x68] sm:$0xff]
    %v921 = vld [vmem:[%s906 + $0x70] sm:$0xff]
    %v922 = vld [vmem:[%s906 + $0x78] sm:$0xff]
    %v923 = vld [vmem:[%s906 + $0x80] sm:$0xff]
    %v924 = vld [vmem:[%s906 + $0x88] sm:$0xff]
    %v925 = vld [vmem:[%s906 + $0x90] sm:$0xff]
    %v926 = vld [vmem:[%s906 + $0x98] sm:$0xff]
    %v927 = vld [vmem:[%s906 + $0xa0] sm:$0xff]
    %v928 = vld [vmem:[%s906 + $0xa8] sm:$0xff]
    %v929 = vld [vmem:[%s906 + $0xb0] sm:$0xff]
    %v930 = vld [vmem:[%s906 + $0xb8] sm:$0xff]
    %v931 = vld [vmem:[%s906 + $0xc0] sm:$0xff]
    %v932 = vld [vmem:[%s906 + $0xc8] sm:$0xff]
    %v933 = vld [vmem:[%s906 + $0xd0] sm:$0xff]
    %v934 = vld [vmem:[%s906 + $0xd8] sm:$0xff]
    %v935 = vld [vmem:[%s906 + $0xe0] sm:$0xff]
    %v936 = vld [vmem:[%s906 + $0xe8] sm:$0xff]
    %v937 = vld [vmem:[%s906 + $0xf0] sm:$0xff]
    %v938 = vld [vmem:[%s906 + $0xf8] sm:$0xff]
    %s939 = scalar_lea.vmem %s4, 6
    %v940 = vld [vmem:[%s939] sm:$0x3]
    %v942 = vlaneseq
    %v943 = vshrl.u32 %v942, 7
    %v944 = vsub.s32 0, %v943
    %v945 = vrot.slane %v940, %v944
    %v946 = vlaneseq
    %v947 = vshrl.u32 %v946, 7
    %v948 = vsub.s32 1, %v947
    %v949 = vrot.slane %v940, %v948
    %v984 = vunpack.c.l.b16 %v907
    %v985 = vunpack.c.h.b16 %v907
    %v986 = vunpack.c.l.b16 %v908
    %v987 = vunpack.c.h.b16 %v908
    %v988 = vunpack.c.l.b16 %v909
    %v989 = vunpack.c.h.b16 %v909
    %v990 = vunpack.c.l.b16 %v910
    %v991 = vunpack.c.h.b16 %v910
    %v992 = vunpack.c.l.b16 %v911
    %v993 = vunpack.c.h.b16 %v911
    %v994 = vunpack.c.l.b16 %v912
    %v995 = vunpack.c.h.b16 %v912
    %v996 = vunpack.c.l.b16 %v913
    %v997 = vunpack.c.h.b16 %v913
    %v998 = vunpack.c.l.b16 %v914
    %v999 = vunpack.c.h.b16 %v914
    %v1000 = vunpack.c.l.b16 %v915
    %v1001 = vunpack.c.h.b16 %v915
    %v1002 = vunpack.c.l.b16 %v916
    %v1003 = vunpack.c.h.b16 %v916
    %v1004 = vunpack.c.l.b16 %v917
    %v1005 = vunpack.c.h.b16 %v917
    %v1006 = vunpack.c.l.b16 %v918
    %v1007 = vunpack.c.h.b16 %v918
    %v1008 = vunpack.c.l.b16 %v919
    %v1009 = vunpack.c.h.b16 %v919
    %v1010 = vunpack.c.l.b16 %v920
    %v1011 = vunpack.c.h.b16 %v920
    %v1012 = vunpack.c.l.b16 %v921
    %v1013 = vunpack.c.h.b16 %v921
    %v1014 = vunpack.c.l.b16 %v922
    %v1015 = vunpack.c.h.b16 %v922
    %v1016 = vunpack.c.l.b16 %v923
    %v1017 = vunpack.c.h.b16 %v923
    %v1018 = vunpack.c.l.b16 %v924
    %v1019 = vunpack.c.h.b16 %v924
    %v1020 = vunpack.c.l.b16 %v925
    %v1021 = vunpack.c.h.b16 %v925
    %v1022 = vunpack.c.l.b16 %v926
    %v1023 = vunpack.c.h.b16 %v926
    %v1024 = vunpack.c.l.b16 %v927
    %v1025 = vunpack.c.h.b16 %v927
    %v1026 = vunpack.c.l.b16 %v928
    %v1027 = vunpack.c.h.b16 %v928
    %v1028 = vunpack.c.l.b16 %v929
    %v1029 = vunpack.c.h.b16 %v929
    %v1030 = vunpack.c.l.b16 %v930
    %v1031 = vunpack.c.h.b16 %v930
    %v1032 = vunpack.c.l.b16 %v931
    %v1033 = vunpack.c.h.b16 %v931
    %v1034 = vunpack.c.l.b16 %v932
    %v1035 = vunpack.c.h.b16 %v932
    %v1036 = vunpack.c.l.b16 %v933
    %v1037 = vunpack.c.h.b16 %v933
    %v1038 = vunpack.c.l.b16 %v934
    %v1039 = vunpack.c.h.b16 %v934
    %v1040 = vunpack.c.l.b16 %v935
    %v1041 = vunpack.c.h.b16 %v935
    %v1042 = vunpack.c.l.b16 %v936
    %v1043 = vunpack.c.h.b16 %v936
    %v1044 = vunpack.c.l.b16 %v937
    %v1045 = vunpack.c.h.b16 %v937
    %v1046 = vunpack.c.l.b16 %v938
    %v1047 = vunpack.c.h.b16 %v938
    %v1048 = vpack.c.b16 %v986, %v984
    %v1049 = vpack.c.b16 %v987, %v985
    %v1050 = vpack.c.b16 %v990, %v988
    %v1051 = vpack.c.b16 %v991, %v989
    %v1052 = vpack.c.b16 %v994, %v992
    %v1053 = vpack.c.b16 %v995, %v993
    %v1054 = vpack.c.b16 %v998, %v996
    %v1055 = vpack.c.b16 %v999, %v997
    %v1056 = vpack.c.b16 %v1002, %v1000
    %v1057 = vpack.c.b16 %v1003, %v1001
    %v1058 = vpack.c.b16 %v1006, %v1004
    %v1059 = vpack.c.b16 %v1007, %v1005
    %v1060 = vpack.c.b16 %v1010, %v1008
    %v1061 = vpack.c.b16 %v1011, %v1009
    %v1062 = vpack.c.b16 %v1014, %v1012
    %v1063 = vpack.c.b16 %v1015, %v1013
    %v1064 = vpack.c.b16 %v1018, %v1016
    %v1065 = vpack.c.b16 %v1019, %v1017
    %v1066 = vpack.c.b16 %v1022, %v1020
    %v1067 = vpack.c.b16 %v1023, %v1021
    %v1068 = vpack.c.b16 %v1026, %v1024
    %v1069 = vpack.c.b16 %v1027, %v1025
    %v1070 = vpack.c.b16 %v1030, %v1028
    %v1071 = vpack.c.b16 %v1031, %v1029
    %v1072 = vpack.c.b16 %v1034, %v1032
    %v1073 = vpack.c.b16 %v1035, %v1033
    %v1074 = vpack.c.b16 %v1038, %v1036
    %v1075 = vpack.c.b16 %v1039, %v1037
    %v1076 = vpack.c.b16 %v1042, %v1040
    %v1077 = vpack.c.b16 %v1043, %v1041
    %v1078 = vpack.c.b16 %v1046, %v1044
    %v1079 = vpack.c.b16 %v1047, %v1045
    %1112 = vmatprep.subr.bf16.mxu0 %v1049
    %1113 = vmatpush1.bf16.msra.mxu0 %v1048
    %1114 = vmatprep.subr.bf16.mxu0 %v1051
    %1115 = vmatpush1.bf16.msra.mxu0 %v1050
    %1116 = vmatprep.subr.bf16.mxu0 %v1053
    %1117 = vmatpush1.bf16.msra.mxu0 %v1052
    %1118 = vmatprep.subr.bf16.mxu0 %v1055
    %1119 = vmatpush1.bf16.msra.mxu0 %v1054
    %1120 = vmatprep.subr.bf16.mxu0 %v1057
    %1121 = vmatpush1.bf16.msra.mxu0 %v1056
    %1122 = vmatprep.subr.bf16.mxu0 %v1059
    %1123 = vmatpush1.bf16.msra.mxu0 %v1058
    %1124 = vmatprep.subr.bf16.mxu0 %v1061
    %1125 = vmatpush1.bf16.msra.mxu0 %v1060
    %1126 = vmatprep.subr.bf16.mxu0 %v1063
    %1127 = vmatpush1.bf16.msra.mxu0 %v1062
    %1128 = vmatprep.subr.bf16.mxu0 %v1065
    %1129 = vmatpush1.bf16.msra.mxu0 %v1064
    %1130 = vmatprep.subr.bf16.mxu0 %v1067
    %1131 = vmatpush1.bf16.msra.mxu0 %v1066
    %1132 = vmatprep.subr.bf16.mxu0 %v1069
    %1133 = vmatpush1.bf16.msra.mxu0 %v1068
    %1134 = vmatprep.subr.bf16.mxu0 %v1071
    %1135 = vmatpush1.bf16.msra.mxu0 %v1070
    %1136 = vmatprep.subr.bf16.mxu0 %v1073
    %1137 = vmatpush1.bf16.msra.mxu0 %v1072
    %1138 = vmatprep.subr.bf16.mxu0 %v1075
    %1139 = vmatpush1.bf16.msra.mxu0 %v1074
    %1140 = vmatprep.subr.bf16.mxu0 %v1077
    %1141 = vmatpush1.bf16.msra.mxu0 %v1076
    %1142 = vmatprep.subr.bf16.mxu0 %v1079
    %1143 = vmatpush1.bf16.msra.mxu0 %v1078
    %1144 = vmatprep.mubr.bf16.mxu0 %v905
    %1145 = vmatmul.mubr.bf16.gmra.mrb[0].mxu0 %v904
    %v1146 = vpop.f32.mrb[0].mxu0
    %v1147 = vadd.f32 %v945, %v1146
    %v1148 = vpop.f32.mrb[0].mxu0
    %v1149 = vadd.f32 %v949, %v1148
    %v1150 = vpop.f32.mrb[0].mxu0
    %v1151 = vpop.f32.mrb[0].mxu0
    %1152 = vdwg.mxu0
    %v1153 = vpack.c.bf16 %v1147, %v1147
    %v1154 = vpack.c.bf16 %v1149, %v1149
    %v1155 = vmax.bf16 %v1153, 0
    %v1156 = vmax.bf16 %v1154, 0
    %s1157 = scalar_lea.vmem [#allocation7], 1024
    %v1158 = vld [vmem:[%s1157] sm:$0xff]
    %v1159 = vld [vmem:[%s1157 + $0x8] sm:$0xff]
    %v1160 = vld [vmem:[%s1157 + $0x10] sm:$0xff]
    %v1161 = vld [vmem:[%s1157 + $0x18] sm:$0xff]
    %v1162 = vld [vmem:[%s1157 + $0x20] sm:$0xff]
    %v1163 = vld [vmem:[%s1157 + $0x28] sm:$0xff]
    %v1164 = vld [vmem:[%s1157 + $0x30] sm:$0xff]
    %v1165 = vld [vmem:[%s1157 + $0x38] sm:$0xff]
    %v1166 = vld [vmem:[%s1157 + $0x40] sm:$0xff]
    %v1167 = vld [vmem:[%s1157 + $0x48] sm:$0xff]
    %v1168 = vld [vmem:[%s1157 + $0x50] sm:$0xff]
    %v1169 = vld [vmem:[%s1157 + $0x58] sm:$0xff]
    %v1170 = vld [vmem:[%s1157 + $0x60] sm:$0xff]
    %v1171 = vld [vmem:[%s1157 + $0x68] sm:$0xff]
    %v1172 = vld [vmem:[%s1157 + $0x70] sm:$0xff]
    %v1173 = vld [vmem:[%s1157 + $0x78] sm:$0xff]
    %v1174 = vld [vmem:[%s1157 + $0x80] sm:$0xff]
    %v1175 = vld [vmem:[%s1157 + $0x88] sm:$0xff]
    %v1176 = vld [vmem:[%s1157 + $0x90] sm:$0xff]
    %v1177 = vld [vmem:[%s1157 + $0x98] sm:$0xff]
    %v1178 = vld [vmem:[%s1157 + $0xa0] sm:$0xff]
    %v1179 = vld [vmem:[%s1157 + $0xa8] sm:$0xff]
    %v1180 = vld [vmem:[%s1157 + $0xb0] sm:$0xff]
    %v1181 = vld [vmem:[%s1157 + $0xb8] sm:$0xff]
    %v1182 = vld [vmem:[%s1157 + $0xc0] sm:$0xff]
    %v1183 = vld [vmem:[%s1157 + $0xc8] sm:$0xff]
    %v1184 = vld [vmem:[%s1157 + $0xd0] sm:$0xff]
    %v1185 = vld [vmem:[%s1157 + $0xd8] sm:$0xff]
    %v1186 = vld [vmem:[%s1157 + $0xe0] sm:$0xff]
    %v1187 = vld [vmem:[%s1157 + $0xe8] sm:$0xff]
    %v1188 = vld [vmem:[%s1157 + $0xf0] sm:$0xff]
    %v1189 = vld [vmem:[%s1157 + $0xf8] sm:$0xff]
    %s1190 = scalar_lea.vmem %s4, 8
    %v1191 = vld [vmem:[%s1190] sm:$0x3]
    %v1193 = vlaneseq
    %v1194 = vshrl.u32 %v1193, 7
    %v1195 = vsub.s32 0, %v1194
    %v1196 = vrot.slane %v1191, %v1195
    %v1197 = vlaneseq
    %v1198 = vshrl.u32 %v1197, 7
    %v1199 = vsub.s32 1, %v1198
    %v1200 = vrot.slane %v1191, %v1199
    %v1235 = vunpack.c.l.b16 %v1158
    %v1236 = vunpack.c.h.b16 %v1158
    %v1237 = vunpack.c.l.b16 %v1159
    %v1238 = vunpack.c.h.b16 %v1159
    %v1239 = vunpack.c.l.b16 %v1160
    %v1240 = vunpack.c.h.b16 %v1160
    %v1241 = vunpack.c.l.b16 %v1161
    %v1242 = vunpack.c.h.b16 %v1161
    %v1243 = vunpack.c.l.b16 %v1162
    %v1244 = vunpack.c.h.b16 %v1162
    %v1245 = vunpack.c.l.b16 %v1163
    %v1246 = vunpack.c.h.b16 %v1163
    %v1247 = vunpack.c.l.b16 %v1164
    %v1248 = vunpack.c.h.b16 %v1164
    %v1249 = vunpack.c.l.b16 %v1165
    %v1250 = vunpack.c.h.b16 %v1165
    %v1251 = vunpack.c.l.b16 %v1166
    %v1252 = vunpack.c.h.b16 %v1166
    %v1253 = vunpack.c.l.b16 %v1167
    %v1254 = vunpack.c.h.b16 %v1167
    %v1255 = vunpack.c.l.b16 %v1168
    %v1256 = vunpack.c.h.b16 %v1168
    %v1257 = vunpack.c.l.b16 %v1169
    %v1258 = vunpack.c.h.b16 %v1169
    %v1259 = vunpack.c.l.b16 %v1170
    %v1260 = vunpack.c.h.b16 %v1170
    %v1261 = vunpack.c.l.b16 %v1171
    %v1262 = vunpack.c.h.b16 %v1171
    %v1263 = vunpack.c.l.b16 %v1172
    %v1264 = vunpack.c.h.b16 %v1172
    %v1265 = vunpack.c.l.b16 %v1173
    %v1266 = vunpack.c.h.b16 %v1173
    %v1267 = vunpack.c.l.b16 %v1174
    %v1268 = vunpack.c.h.b16 %v1174
    %v1269 = vunpack.c.l.b16 %v1175
    %v1270 = vunpack.c.h.b16 %v1175
    %v1271 = vunpack.c.l.b16 %v1176
    %v1272 = vunpack.c.h.b16 %v1176
    %v1273 = vunpack.c.l.b16 %v1177
    %v1274 = vunpack.c.h.b16 %v1177
    %v1275 = vunpack.c.l.b16 %v1178
    %v1276 = vunpack.c.h.b16 %v1178
    %v1277 = vunpack.c.l.b16 %v1179
    %v1278 = vunpack.c.h.b16 %v1179
    %v1279 = vunpack.c.l.b16 %v1180
    %v1280 = vunpack.c.h.b16 %v1180
    %v1281 = vunpack.c.l.b16 %v1181
    %v1282 = vunpack.c.h.b16 %v1181
    %v1283 = vunpack.c.l.b16 %v1182
    %v1284 = vunpack.c.h.b16 %v1182
    %v1285 = vunpack.c.l.b16 %v1183
    %v1286 = vunpack.c.h.b16 %v1183
    %v1287 = vunpack.c.l.b16 %v1184
    %v1288 = vunpack.c.h.b16 %v1184
    %v1289 = vunpack.c.l.b16 %v1185
    %v1290 = vunpack.c.h.b16 %v1185
    %v1291 = vunpack.c.l.b16 %v1186
    %v1292 = vunpack.c.h.b16 %v1186
    %v1293 = vunpack.c.l.b16 %v1187
    %v1294 = vunpack.c.h.b16 %v1187
    %v1295 = vunpack.c.l.b16 %v1188
    %v1296 = vunpack.c.h.b16 %v1188
    %v1297 = vunpack.c.l.b16 %v1189
    %v1298 = vunpack.c.h.b16 %v1189
    %v1299 = vpack.c.b16 %v1237, %v1235
    %v1300 = vpack.c.b16 %v1238, %v1236
    %v1301 = vpack.c.b16 %v1241, %v1239
    %v1302 = vpack.c.b16 %v1242, %v1240
    %v1303 = vpack.c.b16 %v1245, %v1243
    %v1304 = vpack.c.b16 %v1246, %v1244
    %v1305 = vpack.c.b16 %v1249, %v1247
    %v1306 = vpack.c.b16 %v1250, %v1248
    %v1307 = vpack.c.b16 %v1253, %v1251
    %v1308 = vpack.c.b16 %v1254, %v1252
    %v1309 = vpack.c.b16 %v1257, %v1255
    %v1310 = vpack.c.b16 %v1258, %v1256
    %v1311 = vpack.c.b16 %v1261, %v1259
    %v1312 = vpack.c.b16 %v1262, %v1260
    %v1313 = vpack.c.b16 %v1265, %v1263
    %v1314 = vpack.c.b16 %v1266, %v1264
    %v1315 = vpack.c.b16 %v1269, %v1267
    %v1316 = vpack.c.b16 %v1270, %v1268
    %v1317 = vpack.c.b16 %v1273, %v1271
    %v1318 = vpack.c.b16 %v1274, %v1272
    %v1319 = vpack.c.b16 %v1277, %v1275
    %v1320 = vpack.c.b16 %v1278, %v1276
    %v1321 = vpack.c.b16 %v1281, %v1279
    %v1322 = vpack.c.b16 %v1282, %v1280
    %v1323 = vpack.c.b16 %v1285, %v1283
    %v1324 = vpack.c.b16 %v1286, %v1284
    %v1325 = vpack.c.b16 %v1289, %v1287
    %v1326 = vpack.c.b16 %v1290, %v1288
    %v1327 = vpack.c.b16 %v1293, %v1291
    %v1328 = vpack.c.b16 %v1294, %v1292
    %v1329 = vpack.c.b16 %v1297, %v1295
    %v1330 = vpack.c.b16 %v1298, %v1296
    %1363 = vmatprep.subr.bf16.mxu0 %v1300
    %1364 = vmatpush1.bf16.msra.mxu0 %v1299
    %1365 = vmatprep.subr.bf16.mxu0 %v1302
    %1366 = vmatpush1.bf16.msra.mxu0 %v1301
    %1367 = vmatprep.subr.bf16.mxu0 %v1304
    %1368 = vmatpush1.bf16.msra.mxu0 %v1303
    %1369 = vmatprep.subr.bf16.mxu0 %v1306
    %1370 = vmatpush1.bf16.msra.mxu0 %v1305
    %1371 = vmatprep.subr.bf16.mxu0 %v1308
    %1372 = vmatpush1.bf16.msra.mxu0 %v1307
    %1373 = vmatprep.subr.bf16.mxu0 %v1310
    %1374 = vmatpush1.bf16.msra.mxu0 %v1309
    %1375 = vmatprep.subr.bf16.mxu0 %v1312
    %1376 = vmatpush1.bf16.msra.mxu0 %v1311
    %1377 = vmatprep.subr.bf16.mxu0 %v1314
    %1378 = vmatpush1.bf16.msra.mxu0 %v1313
    %1379 = vmatprep.subr.bf16.mxu0 %v1316
    %1380 = vmatpush1.bf16.msra.mxu0 %v1315
    %1381 = vmatprep.subr.bf16.mxu0 %v1318
    %1382 = vmatpush1.bf16.msra.mxu0 %v1317
    %1383 = vmatprep.subr.bf16.mxu0 %v1320
    %1384 = vmatpush1.bf16.msra.mxu0 %v1319
    %1385 = vmatprep.subr.bf16.mxu0 %v1322
    %1386 = vmatpush1.bf16.msra.mxu0 %v1321
    %1387 = vmatprep.subr.bf16.mxu0 %v1324
    %1388 = vmatpush1.bf16.msra.mxu0 %v1323
    %1389 = vmatprep.subr.bf16.mxu0 %v1326
    %1390 = vmatpush1.bf16.msra.mxu0 %v1325
    %1391 = vmatprep.subr.bf16.mxu0 %v1328
    %1392 = vmatpush1.bf16.msra.mxu0 %v1327
    %1393 = vmatprep.subr.bf16.mxu0 %v1330
    %1394 = vmatpush1.bf16.msra.mxu0 %v1329
    %1395 = vmatprep.mubr.bf16.mxu0 %v1156
    %1396 = vmatmul.mubr.bf16.gmra.mrb[0].mxu0 %v1155
    %v1397 = vpop.f32.mrb[0].mxu0
    %v1398 = vadd.f32 %v1196, %v1397
    %v1399 = vpop.f32.mrb[0].mxu0
    %v1400 = vadd.f32 %v1200, %v1399
    %v1401 = vpop.f32.mrb[0].mxu0
    %v1402 = vpop.f32.mrb[0].mxu0
    %1403 = vdwg.mxu0
    %v1404 = vpack.c.bf16 %v1398, %v1398
    %v1405 = vpack.c.bf16 %v1400, %v1400
    %v1406 = vmax.bf16 %v1404, 0
    %v1407 = vmax.bf16 %v1405, 0
    %s1408 = scalar_lea.vmem [#allocation7], 1280
    %v1409 = vld [vmem:[%s1408] sm:$0xff]
    %v1410 = vld [vmem:[%s1408 + $0x8] sm:$0xff]
    %v1411 = vld [vmem:[%s1408 + $0x10] sm:$0xff]
    %v1412 = vld [vmem:[%s1408 + $0x18] sm:$0xff]
    %v1413 = vld [vmem:[%s1408 + $0x20] sm:$0xff]
    %v1414 = vld [vmem:[%s1408 + $0x28] sm:$0xff]
    %v1415 = vld [vmem:[%s1408 + $0x30] sm:$0xff]
    %v1416 = vld [vmem:[%s1408 + $0x38] sm:$0xff]
    %v1417 = vld [vmem:[%s1408 + $0x40] sm:$0xff]
    %v1418 = vld [vmem:[%s1408 + $0x48] sm:$0xff]
    %v1419 = vld [vmem:[%s1408 + $0x50] sm:$0xff]
    %v1420 = vld [vmem:[%s1408 + $0x58] sm:$0xff]
    %v1421 = vld [vmem:[%s1408 + $0x60] sm:$0xff]
    %v1422 = vld [vmem:[%s1408 + $0x68] sm:$0xff]
    %v1423 = vld [vmem:[%s1408 + $0x70] sm:$0xff]
    %v1424 = vld [vmem:[%s1408 + $0x78] sm:$0xff]
    %v1425 = vld [vmem:[%s1408 + $0x80] sm:$0xff]
    %v1426 = vld [vmem:[%s1408 + $0x88] sm:$0xff]
    %v1427 = vld [vmem:[%s1408 + $0x90] sm:$0xff]
    %v1428 = vld [vmem:[%s1408 + $0x98] sm:$0xff]
    %v1429 = vld [vmem:[%s1408 + $0xa0] sm:$0xff]
    %v1430 = vld [vmem:[%s1408 + $0xa8] sm:$0xff]
    %v1431 = vld [vmem:[%s1408 + $0xb0] sm:$0xff]
    %v1432 = vld [vmem:[%s1408 + $0xb8] sm:$0xff]
    %v1433 = vld [vmem:[%s1408 + $0xc0] sm:$0xff]
    %v1434 = vld [vmem:[%s1408 + $0xc8] sm:$0xff]
    %v1435 = vld [vmem:[%s1408 + $0xd0] sm:$0xff]
    %v1436 = vld [vmem:[%s1408 + $0xd8] sm:$0xff]
    %v1437 = vld [vmem:[%s1408 + $0xe0] sm:$0xff]
    %v1438 = vld [vmem:[%s1408 + $0xe8] sm:$0xff]
    %v1439 = vld [vmem:[%s1408 + $0xf0] sm:$0xff]
    %v1440 = vld [vmem:[%s1408 + $0xf8] sm:$0xff]
    %s1441 = scalar_lea.vmem %s4, 10
    %v1442 = vld [vmem:[%s1441] sm:$0x3]
    %v1444 = vlaneseq
    %v1445 = vshrl.u32 %v1444, 7
    %v1446 = vsub.s32 0, %v1445
    %v1447 = vrot.slane %v1442, %v1446
    %v1448 = vlaneseq
    %v1449 = vshrl.u32 %v1448, 7
    %v1450 = vsub.s32 1, %v1449
    %v1451 = vrot.slane %v1442, %v1450
    %v1486 = vunpack.c.l.b16 %v1409
    %v1487 = vunpack.c.h.b16 %v1409
    %v1488 = vunpack.c.l.b16 %v1410
    %v1489 = vunpack.c.h.b16 %v1410
    %v1490 = vunpack.c.l.b16 %v1411
    %v1491 = vunpack.c.h.b16 %v1411
    %v1492 = vunpack.c.l.b16 %v1412
    %v1493 = vunpack.c.h.b16 %v1412
    %v1494 = vunpack.c.l.b16 %v1413
    %v1495 = vunpack.c.h.b16 %v1413
    %v1496 = vunpack.c.l.b16 %v1414
    %v1497 = vunpack.c.h.b16 %v1414
    %v1498 = vunpack.c.l.b16 %v1415
    %v1499 = vunpack.c.h.b16 %v1415
    %v1500 = vunpack.c.l.b16 %v1416
    %v1501 = vunpack.c.h.b16 %v1416
    %v1502 = vunpack.c.l.b16 %v1417
    %v1503 = vunpack.c.h.b16 %v1417
    %v1504 = vunpack.c.l.b16 %v1418
    %v1505 = vunpack.c.h.b16 %v1418
    %v1506 = vunpack.c.l.b16 %v1419
    %v1507 = vunpack.c.h.b16 %v1419
    %v1508 = vunpack.c.l.b16 %v1420
    %v1509 = vunpack.c.h.b16 %v1420
    %v1510 = vunpack.c.l.b16 %v1421
    %v1511 = vunpack.c.h.b16 %v1421
    %v1512 = vunpack.c.l.b16 %v1422
    %v1513 = vunpack.c.h.b16 %v1422
    %v1514 = vunpack.c.l.b16 %v1423
    %v1515 = vunpack.c.h.b16 %v1423
    %v1516 = vunpack.c.l.b16 %v1424
    %v1517 = vunpack.c.h.b16 %v1424
    %v1518 = vunpack.c.l.b16 %v1425
    %v1519 = vunpack.c.h.b16 %v1425
    %v1520 = vunpack.c.l.b16 %v1426
    %v1521 = vunpack.c.h.b16 %v1426
    %v1522 = vunpack.c.l.b16 %v1427
    %v1523 = vunpack.c.h.b16 %v1427
    %v1524 = vunpack.c.l.b16 %v1428
    %v1525 = vunpack.c.h.b16 %v1428
    %v1526 = vunpack.c.l.b16 %v1429
    %v1527 = vunpack.c.h.b16 %v1429
    %v1528 = vunpack.c.l.b16 %v1430
    %v1529 = vunpack.c.h.b16 %v1430
    %v1530 = vunpack.c.l.b16 %v1431
    %v1531 = vunpack.c.h.b16 %v1431
    %v1532 = vunpack.c.l.b16 %v1432
    %v1533 = vunpack.c.h.b16 %v1432
    %v1534 = vunpack.c.l.b16 %v1433
    %v1535 = vunpack.c.h.b16 %v1433
    %v1536 = vunpack.c.l.b16 %v1434
    %v1537 = vunpack.c.h.b16 %v1434
    %v1538 = vunpack.c.l.b16 %v1435
    %v1539 = vunpack.c.h.b16 %v1435
    %v1540 = vunpack.c.l.b16 %v1436
    %v1541 = vunpack.c.h.b16 %v1436
    %v1542 = vunpack.c.l.b16 %v1437
    %v1543 = vunpack.c.h.b16 %v1437
    %v1544 = vunpack.c.l.b16 %v1438
    %v1545 = vunpack.c.h.b16 %v1438
    %v1546 = vunpack.c.l.b16 %v1439
    %v1547 = vunpack.c.h.b16 %v1439
    %v1548 = vunpack.c.l.b16 %v1440
    %v1549 = vunpack.c.h.b16 %v1440
    %v1550 = vpack.c.b16 %v1488, %v1486
    %v1551 = vpack.c.b16 %v1489, %v1487
    %v1552 = vpack.c.b16 %v1492, %v1490
    %v1553 = vpack.c.b16 %v1493, %v1491
    %v1554 = vpack.c.b16 %v1496, %v1494
    %v1555 = vpack.c.b16 %v1497, %v1495
    %v1556 = vpack.c.b16 %v1500, %v1498
    %v1557 = vpack.c.b16 %v1501, %v1499
    %v1558 = vpack.c.b16 %v1504, %v1502
    %v1559 = vpack.c.b16 %v1505, %v1503
    %v1560 = vpack.c.b16 %v1508, %v1506
    %v1561 = vpack.c.b16 %v1509, %v1507
    %v1562 = vpack.c.b16 %v1512, %v1510
    %v1563 = vpack.c.b16 %v1513, %v1511
    %v1564 = vpack.c.b16 %v1516, %v1514
    %v1565 = vpack.c.b16 %v1517, %v1515
    %v1566 = vpack.c.b16 %v1520, %v1518
    %v1567 = vpack.c.b16 %v1521, %v1519
    %v1568 = vpack.c.b16 %v1524, %v1522
    %v1569 = vpack.c.b16 %v1525, %v1523
    %v1570 = vpack.c.b16 %v1528, %v1526
    %v1571 = vpack.c.b16 %v1529, %v1527
    %v1572 = vpack.c.b16 %v1532, %v1530
    %v1573 = vpack.c.b16 %v1533, %v1531
    %v1574 = vpack.c.b16 %v1536, %v1534
    %v1575 = vpack.c.b16 %v1537, %v1535
    %v1576 = vpack.c.b16 %v1540, %v1538
    %v1577 = vpack.c.b16 %v1541, %v1539
    %v1578 = vpack.c.b16 %v1544, %v1542
    %v1579 = vpack.c.b16 %v1545, %v1543
    %v1580 = vpack.c.b16 %v1548, %v1546
    %v1581 = vpack.c.b16 %v1549, %v1547
    %1614 = vmatprep.subr.bf16.mxu0 %v1551
    %1615 = vmatpush1.bf16.msra.mxu0 %v1550
    %1616 = vmatprep.subr.bf16.mxu0 %v1553
    %1617 = vmatpush1.bf16.msra.mxu0 %v1552
    %1618 = vmatprep.subr.bf16.mxu0 %v1555
    %1619 = vmatpush1.bf16.msra.mxu0 %v1554
    %1620 = vmatprep.subr.bf16.mxu0 %v1557
    %1621 = vmatpush1.bf16.msra.mxu0 %v1556
    %1622 = vmatprep.subr.bf16.mxu0 %v1559
    %1623 = vmatpush1.bf16.msra.mxu0 %v1558
    %1624 = vmatprep.subr.bf16.mxu0 %v1561
    %1625 = vmatpush1.bf16.msra.mxu0 %v1560
    %1626 = vmatprep.subr.bf16.mxu0 %v1563
    %1627 = vmatpush1.bf16.msra.mxu0 %v1562
    %1628 = vmatprep.subr.bf16.mxu0 %v1565
    %1629 = vmatpush1.bf16.msra.mxu0 %v1564
    %1630 = vmatprep.subr.bf16.mxu0 %v1567
    %1631 = vmatpush1.bf16.msra.mxu0 %v1566
    %1632 = vmatprep.subr.bf16.mxu0 %v1569
    %1633 = vmatpush1.bf16.msra.mxu0 %v1568
    %1634 = vmatprep.subr.bf16.mxu0 %v1571
    %1635 = vmatpush1.bf16.msra.mxu0 %v1570
    %1636 = vmatprep.subr.bf16.mxu0 %v1573
    %1637 = vmatpush1.bf16.msra.mxu0 %v1572
    %1638 = vmatprep.subr.bf16.mxu0 %v1575
    %1639 = vmatpush1.bf16.msra.mxu0 %v1574
    %1640 = vmatprep.subr.bf16.mxu0 %v1577
    %1641 = vmatpush1.bf16.msra.mxu0 %v1576
    %1642 = vmatprep.subr.bf16.mxu0 %v1579
    %1643 = vmatpush1.bf16.msra.mxu0 %v1578
    %1644 = vmatprep.subr.bf16.mxu0 %v1581
    %1645 = vmatpush1.bf16.msra.mxu0 %v1580
    %1646 = vmatprep.mubr.bf16.mxu0 %v1407
    %1647 = vmatmul.mubr.bf16.gmra.mrb[0].mxu0 %v1406
    %v1648 = vpop.f32.mrb[0].mxu0
    %v1649 = vadd.f32 %v1447, %v1648
    %v1650 = vpop.f32.mrb[0].mxu0
    %v1651 = vadd.f32 %v1451, %v1650
    %v1652 = vpop.f32.mrb[0].mxu0
    %v1653 = vpop.f32.mrb[0].mxu0
    %1654 = vdwg.mxu0
    %v1655 = vpack.c.bf16 %v1649, %v1649
    %v1656 = vpack.c.bf16 %v1651, %v1651
    %v1657 = vmax.bf16 %v1655, 0
    %v1658 = vmax.bf16 %v1656, 0
    %v1659 = vld [vmem:[#allocation8] sm:$0xf]
    %v1660 = vld [vmem:[#allocation8 + $0x4] sm:$0xf]
    %v1661 = vld [vmem:[#allocation8 + $0x8] sm:$0xf]
    %v1662 = vld [vmem:[#allocation8 + $0xc] sm:$0xf]
    %v1663 = vld [vmem:[#allocation8 + $0x10] sm:$0xf]
    %v1664 = vld [vmem:[#allocation8 + $0x14] sm:$0xf]
    %v1665 = vld [vmem:[#allocation8 + $0x18] sm:$0xf]
    %v1666 = vld [vmem:[#allocation8 + $0x1c] sm:$0xf]
    %v1667 = vld [vmem:[#allocation8 + $0x20] sm:$0xf]
    %v1668 = vld [vmem:[#allocation8 + $0x24] sm:$0xf]
    %v1669 = vld [vmem:[#allocation8 + $0x28] sm:$0xf]
    %v1670 = vld [vmem:[#allocation8 + $0x2c] sm:$0xf]
    %v1671 = vld [vmem:[#allocation8 + $0x30] sm:$0xf]
    %v1672 = vld [vmem:[#allocation8 + $0x34] sm:$0xf]
    %v1673 = vld [vmem:[#allocation8 + $0x38] sm:$0xf]
    %v1674 = vld [vmem:[#allocation8 + $0x3c] sm:$0xf]
    %v1675 = vld [vmem:[#allocation8 + $0x40] sm:$0xf]
    %v1676 = vld [vmem:[#allocation8 + $0x44] sm:$0xf]
    %v1677 = vld [vmem:[#allocation8 + $0x48] sm:$0xf]
    %v1678 = vld [vmem:[#allocation8 + $0x4c] sm:$0xf]
    %v1679 = vld [vmem:[#allocation8 + $0x50] sm:$0xf]
    %v1680 = vld [vmem:[#allocation8 + $0x54] sm:$0xf]
    %v1681 = vld [vmem:[#allocation8 + $0x58] sm:$0xf]
    %v1682 = vld [vmem:[#allocation8 + $0x5c] sm:$0xf]
    %v1683 = vld [vmem:[#allocation8 + $0x60] sm:$0xf]
    %v1684 = vld [vmem:[#allocation8 + $0x64] sm:$0xf]
    %v1685 = vld [vmem:[#allocation8 + $0x68] sm:$0xf]
    %v1686 = vld [vmem:[#allocation8 + $0x6c] sm:$0xf]
    %v1687 = vld [vmem:[#allocation8 + $0x70] sm:$0xf]
    %v1688 = vld [vmem:[#allocation8 + $0x74] sm:$0xf]
    %v1689 = vld [vmem:[#allocation8 + $0x78] sm:$0xf]
    %v1690 = vld [vmem:[#allocation8 + $0x7c] sm:$0xf]
    %v1691 = vld [vmem:[%s6] sm:$0x1]
    %v1693 = vlaneseq
    %v1694 = vshrl.u32 %v1693, 7
    %v1695 = vsub.s32 0, %v1694
    %v1696 = vrot.slane %v1691, %v1695
    %v1730 = vunpack.c.l.b16 %v1659
    %v1731 = vunpack.c.l.b16 %v1660
    %v1732 = vunpack.c.l.b16 %v1661
    %v1733 = vunpack.c.l.b16 %v1662
    %v1734 = vunpack.c.l.b16 %v1663
    %v1735 = vunpack.c.l.b16 %v1664
    %v1736 = vunpack.c.l.b16 %v1665
    %v1737 = vunpack.c.l.b16 %v1666
    %v1738 = vunpack.c.l.b16 %v1667
    %v1739 = vunpack.c.l.b16 %v1668
    %v1740 = vunpack.c.l.b16 %v1669
    %v1741 = vunpack.c.l.b16 %v1670
    %v1742 = vunpack.c.l.b16 %v1671
    %v1743 = vunpack.c.l.b16 %v1672
    %v1744 = vunpack.c.l.b16 %v1673
    %v1745 = vunpack.c.l.b16 %v1674
    %v1746 = vunpack.c.l.b16 %v1675
    %v1747 = vunpack.c.l.b16 %v1676
    %v1748 = vunpack.c.l.b16 %v1677
    %v1749 = vunpack.c.l.b16 %v1678
    %v1750 = vunpack.c.l.b16 %v1679
    %v1751 = vunpack.c.l.b16 %v1680
    %v1752 = vunpack.c.l.b16 %v1681
    %v1753 = vunpack.c.l.b16 %v1682
    %v1754 = vunpack.c.l.b16 %v1683
    %v1755 = vunpack.c.l.b16 %v1684
    %v1756 = vunpack.c.l.b16 %v1685
    %v1757 = vunpack.c.l.b16 %v1686
    %v1758 = vunpack.c.l.b16 %v1687
    %v1759 = vunpack.c.l.b16 %v1688
    %v1760 = vunpack.c.l.b16 %v1689
    %v1761 = vunpack.c.l.b16 %v1690
    %v1762 = vpack.c.b16 %v1731, %v1730
    %v1763 = vpack.c.b16 %v1733, %v1732
    %v1764 = vpack.c.b16 %v1735, %v1734
    %v1765 = vpack.c.b16 %v1737, %v1736
    %v1766 = vpack.c.b16 %v1739, %v1738
    %v1767 = vpack.c.b16 %v1741, %v1740
    %v1768 = vpack.c.b16 %v1743, %v1742
    %v1769 = vpack.c.b16 %v1745, %v1744
    %v1770 = vpack.c.b16 %v1747, %v1746
    %v1771 = vpack.c.b16 %v1749, %v1748
    %v1772 = vpack.c.b16 %v1751, %v1750
    %v1773 = vpack.c.b16 %v1753, %v1752
    %v1774 = vpack.c.b16 %v1755, %v1754
    %v1775 = vpack.c.b16 %v1757, %v1756
    %v1776 = vpack.c.b16 %v1759, %v1758
    %v1777 = vpack.c.b16 %v1761, %v1760
    %1794 = vmatprep.subr.bf16.mxu0 0
    %1795 = vmatpush1.bf16.msra.mxu0 %v1762
    %1796 = vmatprep.subr.bf16.mxu0 0
    %1797 = vmatpush1.bf16.msra.mxu0 %v1763
    %1798 = vmatprep.subr.bf16.mxu0 0
    %1799 = vmatpush1.bf16.msra.mxu0 %v1764
    %1800 = vmatprep.subr.bf16.mxu0 0
    %1801 = vmatpush1.bf16.msra.mxu0 %v1765
    %1802 = vmatprep.subr.bf16.mxu0 0
    %1803 = vmatpush1.bf16.msra.mxu0 %v1766
    %1804 = vmatprep.subr.bf16.mxu0 0
    %1805 = vmatpush1.bf16.msra.mxu0 %v1767
    %1806 = vmatprep.subr.bf16.mxu0 0
    %1807 = vmatpush1.bf16.msra.mxu0 %v1768
    %1808 = vmatprep.subr.bf16.mxu0 0
    %1809 = vmatpush1.bf16.msra.mxu0 %v1769
    %1810 = vmatprep.subr.bf16.mxu0 0
    %1811 = vmatpush1.bf16.msra.mxu0 %v1770
    %1812 = vmatprep.subr.bf16.mxu0 0
    %1813 = vmatpush1.bf16.msra.mxu0 %v1771
    %1814 = vmatprep.subr.bf16.mxu0 0
    %1815 = vmatpush1.bf16.msra.mxu0 %v1772
    %1816 = vmatprep.subr.bf16.mxu0 0
    %1817 = vmatpush1.bf16.msra.mxu0 %v1773
    %1818 = vmatprep.subr.bf16.mxu0 0
    %1819 = vmatpush1.bf16.msra.mxu0 %v1774
    %1820 = vmatprep.subr.bf16.mxu0 0
    %1821 = vmatpush1.bf16.msra.mxu0 %v1775
    %1822 = vmatprep.subr.bf16.mxu0 0
    %1823 = vmatpush1.bf16.msra.mxu0 %v1776
    %1824 = vmatprep.subr.bf16.mxu0 0
    %1825 = vmatpush1.bf16.msra.mxu0 %v1777
    %1826 = vmatprep.mubr.bf16.mxu0 %v1658
    %1827 = vmatmul.mubr.bf16.gmra.mrb[0].mxu0 %v1657
    %v1828 = vpop.f32.mrb[0].mxu0
    %v1829 = vadd.f32 %v1696, %v1828
    %v1830 = vpop.f32.mrb[0].mxu0
    %v1831 = vpop.f32.mrb[0].mxu0
    %v1832 = vpop.f32.mrb[0].mxu0
    %1833 = vdwg.mxu0
    %1834 = vst [vmem:[#allocation10] sm:$0xff] %v1829
    // Predicated region
    $region46: #{tpu_custom_call.1} parent=1 // pred_check
      _
    $region47: #{tpu_custom_call.1} parent=1 // pred_check_branch
      %1836 = sbr.rel (0) target = $region49
    $region48: #{tpu_custom_call.1} parent=1 // pred_region
      %s1838 = ssub.s32 128, 128
      %1839 = vsyncadd [#allocation4], %s1838
      %s1841 = sshll.u32 [#allocation10], 4
      %s1842 = int_to_ptr.vmem [resolvable:$true] %s1841
      %1844 = dma.vmem_to_hbm [thread:$0]  %s1842, 128, %s7, [#allocation4]
    $region49: #{tpu_custom_call.1} parent=1 // pred_fallthru
      _
    // Predicated region
    $region50: #{tpu_custom_call.1} parent=1 // pred_check
      _
    $region51: #{tpu_custom_call.1} parent=1 // pred_check_branch
      %1846 = sbr.rel (0) target = $region53
    $region52: #{tpu_custom_call.1} parent=1 // pred_region
      %1847 = dma.done [#allocation4], 128
    $region53: #{tpu_custom_call.1} parent=1 // pred_fallthru
      _
    %1848 = vsyncpa [#allocation3], 1
    %1849 = vsyncpa [#allocation6], 1
    %1850 = vsyncpa [#allocation9], 1
    %1851 = vsyncpa [#allocation4], 1

</llo_original>
